<compile_context>
chip_gen: v5e
topology: v5e:2x2
jax: 0.10.0
libtpu: 0.0.40
codegen_flags: <defaults>
</compile_context>

<pallas_src>
import functools

import jax
import jax.numpy as jnp
from jax import lax
from jax.experimental import pallas as pl
from jax.experimental.pallas import tpu as pltpu

EPS = 1e-5  # PyTorch BatchNorm2d default

# VMEM limit: <= 3/4 of physical capacity, capped at 96 MiB (v5e/v6e have 128 MiB,
# v7x has 64 MiB per TensorCore). Conservative fallback if the query is unavailable.
try:
    _VMEM_LIMIT = int(min(pltpu.get_tpu_info().vmem_capacity_bytes * 3 // 4,
                          96 * 1024 * 1024))
except Exception:
    _VMEM_LIMIT = 48 * 1024 * 1024


def _cout_tiles(cout):
    """Cout tile size for the extra parallel grid axis (full when small)."""
    if cout > 256 and cout % 256 == 0:
        return 256, cout // 256
    return cout, 1


# ----------------------------------------------------------------------------- kernels
def _stage1_kernel(x_ref, w_ref, wid_ref, y_ref, id_ref, st_ref, *, stride, ho, wo):
    """conv1 (3x3, stride) + fused 1x1 shortcut (centre tap) + BN statistics.

    x_ref  : (1, s*s, PH, PW, Cin) bf16  stride-phase-decomposed, zero-padded input
    w_ref  : (9*Cin, CoutT)        bf16  conv1 weights, (ky,kx,cin)-flattened K
    wid_ref: (Cin, CoutT)          bf16  1x1 shortcut weights
    y_ref  : (1, ho*wo, CoutT)     bf16  raw conv1 output
    id_ref : (1, ho*wo, CoutT)     bf16  raw shortcut output
    st_ref : (1, 4, CoutT)         f32   [sum1, sumsq1, sum_id, sumsq_id]
    """
    s = stride
    cin = x_ref.shape[-1]
    taps = []
    for ky in range(3):
        for kx in range(3):
            py, qy = ky % s, ky // s
            px, qx = kx % s, kx // s
            taps.append(x_ref[0, py * s + px, qy:qy + ho, qx:qx + wo, :])  # (ho, wo, Cin) bf16
    # In-VMEM im2col: one lane-axis concat + one leading-dim collapse, then ONE MXU dot
    # with K = 9*Cin (no per-tap casts, no 9x accumulator RMW).
    big = jnp.concatenate(taps, axis=-1).reshape(ho * wo, 9 * cin)          # (M, 9*Cin)
    centre = taps[4].reshape(ho * wo, cin)                                  # ky=kx=1 tap
    acc = jnp.dot(big, w_ref[...], preferred_element_type=jnp.float32)     # (M, CoutT)
    acc_id = jnp.dot(centre, wid_ref[...], preferred_element_type=jnp.float32)

    y_ref[0] = acc.astype(y_ref.dtype)
    id_ref[0] = acc_id.astype(id_ref.dtype)
    st_ref[0] = jnp.concatenate(
        [jnp.sum(acc, axis=0, keepdims=True),
         jnp.sum(acc * acc, axis=0, keepdims=True),
         jnp.sum(acc_id, axis=0, keepdims=True),
         jnp.sum(acc_id * acc_id, axis=0, keepdims=True)], axis=0)


def _stage2_kernel(y_ref, mask_ref, ab_ref, w_ref, o_ref, st_ref, *, stride, ho, wo):
    """Fused BN1-affine + ReLU + pad-mask + conv2 (3x3, stride) + BN2 statistics.

    y_ref   : (1, s*s, PH, PW, C) bf16  raw conv1 output, phase-split, zero-padded
    mask_ref: (s*s, PH, PW, 1)    f32   1.0 at valid pixels, 0.0 at padding
    ab_ref  : (2, C)              f32   [scale1, shift1] (batch-stat BN folded affine)
    w_ref   : (9*C, CoutT)        bf16
    o_ref   : (1, ho*wo, CoutT)   bf16  raw conv2 output
    st_ref  : (1, 2, CoutT)       f32   [sum2, sumsq2]
    """
    s = stride
    c = y_ref.shape[-1]
    ab = ab_ref[...]
    sc, sh = ab[0:1], ab[1:2]                            # (1, C), broadcast along lanes
    slab = y_ref[0].astype(jnp.float32)                  # (s*s, PH, PW, C)
    slab = jnp.maximum(slab * sc + sh, 0.0) * mask_ref[...]   # BN1 + ReLU; keep pads 0
    slab = slab.astype(jnp.bfloat16)

    taps = []
    for ky in range(3):
        for kx in range(3):
            py, qy = ky % s, ky // s
            px, qx = kx % s, kx // s
            taps.append(slab[py * s + px, qy:qy + ho, qx:qx + wo, :])
    big = jnp.concatenate(taps, axis=-1).reshape(ho * wo, 9 * c)            # (M, 9*C)
    acc = jnp.dot(big, w_ref[...], preferred_element_type=jnp.float32)      # (M, CoutT)

    o_ref[0] = acc.astype(o_ref.dtype)
    st_ref[0] = jnp.concatenate(
        [jnp.sum(acc, axis=0, keepdims=True),
         jnp.sum(acc * acc, axis=0, keepdims=True)], axis=0)


def _finalize_kernel(y2_ref, id_ref, ab_ref, o_ref):
    """out = relu(scale2*y2 + scale_id*id + (shift2+shift_id)); emits NCHW layout."""
    ab = ab_ref[...]
    sc2, sci, sh = ab[0:1], ab[1:2], ab[2:3]             # (1, C) each
    y = (y2_ref[0].astype(jnp.float32) * sc2
         + id_ref[0].astype(jnp.float32) * sci + sh)     # (M, C)
    o_ref[0] = jnp.maximum(y, 0.0).T                     # single NCHW conversion, fused


# ----------------------------------------------------------------------------- pallas wrappers
def _stage1(xph, w1t, widt, ho, wo, stride):
    n, ss, ph, pw, cin = xph.shape
    cout = w1t.shape[-1]
    m = ho * wo
    ct, nct = _cout_tiles(cout)
    kern = functools.partial(_stage1_kernel, stride=stride, ho=ho, wo=wo)
    return pl.pallas_call(
        kern,
        grid=(n, nct),
        in_specs=[
            pl.BlockSpec((1, ss, ph, pw, cin), lambda i, j: (i, 0, 0, 0, 0)),
            pl.BlockSpec((9 * cin, ct), lambda i, j: (0, j)),
            pl.BlockSpec((cin, ct), lambda i, j: (0, j)),
        ],
        out_specs=(
            pl.BlockSpec((1, m, ct), lambda i, j: (i, 0, j)),
            pl.BlockSpec((1, m, ct), lambda i, j: (i, 0, j)),
            pl.BlockSpec((1, 4, ct), lambda i, j: (i, 0, j)),
        ),
        out_shape=(
            jax.ShapeDtypeStruct((n, m, cout), jnp.bfloat16),
            jax.ShapeDtypeStruct((n, m, cout), jnp.bfloat16),
            jax.ShapeDtypeStruct((n, 4, cout), jnp.float32),
        ),
        compiler_params=pltpu.CompilerParams(
            dimension_semantics=("parallel", "parallel"),
            vmem_limit_bytes=_VMEM_LIMIT),
    )(xph, w1t, widt)


def _stage2(yph, mask, ab1, w2t, ho, wo, stride):
    n, ss, ph, pw, c = yph.shape
    cout = w2t.shape[-1]
    m = ho * wo
    ct, nct = _cout_tiles(cout)
    kern = functools.partial(_stage2_kernel, stride=stride, ho=ho, wo=wo)
    return pl.pallas_call(
        kern,
        grid=(n, nct),
        in_specs=[
            pl.BlockSpec((1, ss, ph, pw, c), lambda i, j: (i, 0, 0, 0, 0)),
            pl.BlockSpec((ss, ph, pw, 1), lambda i, j: (0, 0, 0, 0)),
            pl.BlockSpec((2, c), lambda i, j: (0, 0)),
            pl.BlockSpec((9 * c, ct), lambda i, j: (0, j)),
        ],
        out_specs=(
            pl.BlockSpec((1, m, ct), lambda i, j: (i, 0, j)),
            pl.BlockSpec((1, 2, ct), lambda i, j: (i, 0, j)),
        ),
        out_shape=(
            jax.ShapeDtypeStruct((n, m, cout), jnp.bfloat16),
            jax.ShapeDtypeStruct((n, 2, cout), jnp.float32),
        ),
        compiler_params=pltpu.CompilerParams(
            dimension_semantics=("parallel", "parallel"),
            vmem_limit_bytes=_VMEM_LIMIT),
    )(yph, mask, ab1, w2t)


def _finalize(y2, id_raw, ab):
    n, m, c = y2.shape
    return pl.pallas_call(
        _finalize_kernel,
        grid=(n,),
        in_specs=[
            pl.BlockSpec((1, m, c), lambda i: (i, 0, 0)),
            pl.BlockSpec((1, m, c), lambda i: (i, 0, 0)),
            pl.BlockSpec((3, c), lambda i: (0, 0)),
        ],
        out_specs=pl.BlockSpec((1, c, m), lambda i: (i, 0, 0)),
        out_shape=jax.ShapeDtypeStruct((n, c, m), jnp.float32),
        compiler_params=pltpu.CompilerParams(
            dimension_semantics=("parallel",),
            vmem_limit_bytes=_VMEM_LIMIT),
    )(y2, id_raw, ab)


# ----------------------------------------------------------------------------- glue
def _phase_split(x_nhwc, stride, pad):
    """Zero-pad and decompose NHWC into stride phases (same total bytes, no im2col).

    out[n, py*s+px, a, b, c] == x_padded[n, a*s+py, b*s+px, c]
    """
    n, h, w, c = x_nhwc.shape
    s = stride
    ho = (h + 2 * pad - 3) // s + 1
    wo = (w + 2 * pad - 3) // s + 1
    hp = -(-(h + 2 * pad) // s) * s
    wp = -(-(w + 2 * pad) // s) * s
    xp = jnp.pad(x_nhwc, ((0, 0), (pad, hp - h - pad), (pad, wp - w - pad), (0, 0)))
    xp = xp.reshape(n, hp // s, s, wp // s, s, c)
    xp = jnp.transpose(xp, (0, 2, 4, 1, 3, 5)).reshape(n, s * s, hp // s, wp // s, c)
    return xp, ho, wo


def _pad_mask(h, w, stride, pad):
    """(s*s, PH, PW, 1) f32 mask: 1 at valid pixels of the phase grid, 0 at padding."""
    s = stride
    hp = -(-(h + 2 * pad) // s) * s
    wp = -(-(w + 2 * pad) // s) * s
    m = jnp.zeros((hp, wp), jnp.float32).at[pad:pad + h, pad:pad + w].set(1.0)
    m = m.reshape(hp // s, s, wp // s, s)
    m = jnp.transpose(m, (1, 3, 0, 2)).reshape(s * s, hp // s, wp // s, 1)
    return m


def _bn_scale_shift(ssum, ssq, count, gamma, beta):
    """Fold batch-stat BatchNorm into a per-channel affine: y = x*scale + shift."""
    mean = ssum / count
    var = jnp.maximum(ssq / count - mean * mean, 0.0)
    scale = gamma * lax.rsqrt(var + EPS)
    shift = beta - mean * scale
    return scale, shift


def prepare_params(params):
    """One-time weight prep (hoisted out of the forward path)."""
    cout, cin = params["w1"].shape[:2]
    w1t = jnp.transpose(params["w1"], (2, 3, 1, 0)).reshape(9 * cin, cout)
    w2t = jnp.transpose(params["w2"], (2, 3, 1, 0)).reshape(9 * cout, cout)
    widt = jnp.transpose(params["w_id"][:, :, 0, 0], (1, 0))  # (Cin, Cout)
    return dict(
        w1t=w1t.astype(jnp.bfloat16),
        w2t=w2t.astype(jnp.bfloat16),
        widt=widt.astype(jnp.bfloat16),
        g1=params["g1"], b1=params["b1"],
        g_id=params["g_id"], b_id=params["b_id"],
        g2=params["g2"], b2=params["b2"])


def special_block_forward(x_nchw, prep, stride):
    s0, s1 = stride
    n = x_nchw.shape[0]
    c = prep["g2"].shape[0]
    x = jnp.transpose(x_nchw, (0, 2, 3, 1)).astype(jnp.bfloat16)  # NCHW -> NHWC bf16

    # --- stage 1: conv1 (3x3, s0) + 1x1 shortcut (centre tap), raw outputs + BN stats
    xph, h1, w1 = _phase_split(x, s0, 1)
    y1_raw, id_raw, st1 = _stage1(xph, prep["w1t"], prep["widt"], h1, w1, s0)
    st = jnp.sum(st1, axis=0)
    cnt1 = n * h1 * w1
    sc1, sh1 = _bn_scale_shift(st[0], st[1], cnt1, prep["g1"], prep["b1"])
    sci, shi = _bn_scale_shift(st[2], st[3], cnt1, prep["g_id"], prep["b_id"])

    # --- stage 2: BN1+ReLU are applied INSIDE kernel B; only a bf16 pad/phase-split
    #     of the raw conv1 output happens in XLA between the stages.
    y1_img = y1_raw.reshape(n, h1, w1, c)                       # free (metadata only)
    yph, h2, w2 = _phase_split(y1_img, s1, 1)
    mask = _pad_mask(h1, w1, s1, 1)
    ab1 = jnp.stack([sc1, sh1], axis=0)                         # (2, C)
    y2_raw, st2 = _stage2(yph, mask, ab1, prep["w2t"], h2, w2, s1)
    st2s = jnp.sum(st2, axis=0)
    sc2, sh2 = _bn_scale_shift(st2s[0], st2s[1], n * h2 * w2, prep["g2"], prep["b2"])

    # --- stage 3: BN2 + shortcut-BN + residual add + ReLU + NCHW conversion, fused
    if y2_raw.shape != id_raw.shape:
        raise ValueError("residual add requires matching spatial sizes (use stride[1]==1)")
    ab2 = jnp.stack([sc2, sci, sh2 + shi], axis=0)              # (3, C)
    out = _finalize(y2_raw, id_raw, ab2)                        # (n, C, h2*w2) f32
    return out.reshape(n, c, h2, w2)


# ----------------------------------------------------------------------------- reference (pure JAX)
def _bq(a):  # quantise conv inputs to bf16, matching the kernel's MXU inputs
    return a.astype(jnp.bfloat16).astype(jnp.float32)


def _ref_conv(x, w, stride, pad):
    return lax.conv_general_dilated(
        _bq(x), _bq(w), window_strides=(stride, stride),
        padding=((pad, pad), (pad, pad)),
        dimension_numbers=("NCHW", "OIHW", "NCHW"))


def _ref_bn(x, g, b):
    mean = jnp.mean(x, axis=(0, 2, 3), keepdims=True)
    var = jnp.mean((x - mean) ** 2, axis=(0, 2, 3), keepdims=True)
    y = (x - mean) * lax.rsqrt(var + EPS)
    return y * g[None, :, None, None] + b[None, :, None, None]


def special_block_reference(x, p, stride):
    s0, s1 = stride
    identity = _ref_bn(_ref_conv(x, p["w_id"], s0, 0), p["g_id"], p["b_id"])
    y = jax.nn.relu(_ref_bn(_ref_conv(x, p["w1"], s0, 1), p["g1"], p["b1"]))
    y = _ref_bn(_ref_conv(y, p["w2"], s1, 1), p["g2"], p["b2"])
    return jax.nn.relu(y + identity)


# ----------------------------------------------------------------------------- main
if __name__ == "__main__":
    in_channel, out_channel = 4, 8
    stride = (2, 1)
    N, H, W = 2, 16, 16

    key = jax.random.PRNGKey(0)
    k0, k1, k2, k3 = jax.random.split(key, 4)
    params = dict(
        w_id=0.1 * jax.random.normal(k0, (out_channel, in_channel, 1, 1), jnp.float32),
        w1=0.1 * jax.random.normal(k1, (out_channel, in_channel, 3, 3), jnp.float32),
        w2=0.1 * jax.random.normal(k2, (out_channel, out_channel, 3, 3), jnp.float32),
        g_id=jnp.ones((out_channel,), jnp.float32), b_id=jnp.zeros((out_channel,), jnp.float32),
        g1=jnp.ones((out_channel,), jnp.float32), b1=jnp.zeros((out_channel,), jnp.float32),
        g2=jnp.ones((out_channel,), jnp.float32), b2=jnp.zeros((out_channel,), jnp.float32),
    )
    x = jax.random.normal(k3, (N, in_channel, H, W), jnp.float32)

    prep = prepare_params(params)                      # hoisted out of the forward path
    fwd = jax.jit(lambda xx, pp: special_block_forward(xx, pp, stride))

    out = jax.block_until_ready(fwd(x, prep))
    ref = jax.block_until_ready(special_block_reference(x, params, stride))

    assert out.shape == (N, out_channel, H // stride[0], W // stride[0]), out.shape
    # bf16 MXU inputs + bf16 intermediates -> compare at bf16-level tolerance.
    err = float(jnp.max(jnp.abs(out - ref)))
    assert jnp.allclose(out, ref, atol=5e-2, rtol=5e-2), err
    print("KERNEL_OK")
</pallas_src>

<mosaic_0001>
module attributes {stable_mosaic.version = 11 : i64} {
  func.func @_stage1_kernel(%arg0: i32, %arg1: i32, %arg2: memref<1x4x9x9x4xbf16, #tpu.memory_space<vmem>>, %arg3: memref<36x8xbf16, #tpu.memory_space<vmem>>, %arg4: memref<4x8xbf16, #tpu.memory_space<vmem>>, %arg5: memref<1x64x8xbf16, #tpu.memory_space<vmem>>, %arg6: memref<1x64x8xbf16, #tpu.memory_space<vmem>>, %arg7: memref<1x4x8xf32, #tpu.memory_space<vmem>>) attributes {dimension_semantics = [#tpu.dimension_semantics<parallel>, #tpu.dimension_semantics<parallel>], iteration_bounds = array<i64: 2, 1>, scalar_prefetch = 0 : i64, scratch_operands = 0 : i64, tpu.core_type = #tpu.core_type<tc>, window_params = [{transform_indices = @transform_0, window_bounds = array<i64: 1, 4, 9, 9, 4>}, {transform_indices = @transform_1, window_bounds = array<i64: 36, 8>}, {transform_indices = @transform_2, window_bounds = array<i64: 4, 8>}, {transform_indices = @transform_3, window_bounds = array<i64: 1, 64, 8>}, {transform_indices = @transform_4, window_bounds = array<i64: 1, 64, 8>}, {transform_indices = @transform_5, window_bounds = array<i64: 1, 4, 8>}]} {
    %c0 = arith.constant 0 : index
    %c0_0 = arith.constant 0 : index
    %c0_1 = arith.constant 0 : index
    %c0_2 = arith.constant 0 : index
    %c0_3 = arith.constant 0 : index
    %0 = vector.load %arg2[%c0, %c0_0, %c0_1, %c0_2, %c0_3] : memref<1x4x9x9x4xbf16, #tpu.memory_space<vmem>>, vector<1x1x8x8x4xbf16>
    %1 = vector.shape_cast %0 : vector<1x1x8x8x4xbf16> to vector<8x8x4xbf16>
    %c0_4 = arith.constant 0 : index
    %c1 = arith.constant 1 : index
    %c0_5 = arith.constant 0 : index
    %c0_6 = arith.constant 0 : index
    %c0_7 = arith.constant 0 : index
    %2 = vector.load %arg2[%c0_4, %c1, %c0_5, %c0_6, %c0_7] : memref<1x4x9x9x4xbf16, #tpu.memory_space<vmem>>, vector<1x1x8x8x4xbf16>
    %3 = vector.shape_cast %2 : vector<1x1x8x8x4xbf16> to vector<8x8x4xbf16>
    %c0_8 = arith.constant 0 : index
    %c0_9 = arith.constant 0 : index
    %c0_10 = arith.constant 0 : index
    %c1_11 = arith.constant 1 : index
    %c0_12 = arith.constant 0 : index
    %4 = vector.load %arg2[%c0_8, %c0_9, %c0_10, %c1_11, %c0_12] : memref<1x4x9x9x4xbf16, #tpu.memory_space<vmem>>, vector<1x1x8x8x4xbf16>
    %5 = vector.shape_cast %4 : vector<1x1x8x8x4xbf16> to vector<8x8x4xbf16>
    %c0_13 = arith.constant 0 : index
    %c2 = arith.constant 2 : index
    %c0_14 = arith.constant 0 : index
    %c0_15 = arith.constant 0 : index
    %c0_16 = arith.constant 0 : index
    %6 = vector.load %arg2[%c0_13, %c2, %c0_14, %c0_15, %c0_16] : memref<1x4x9x9x4xbf16, #tpu.memory_space<vmem>>, vector<1x1x8x8x4xbf16>
    %7 = vector.shape_cast %6 : vector<1x1x8x8x4xbf16> to vector<8x8x4xbf16>
    %c0_17 = arith.constant 0 : index
    %c3 = arith.constant 3 : index
    %c0_18 = arith.constant 0 : index
    %c0_19 = arith.constant 0 : index
    %c0_20 = arith.constant 0 : index
    %8 = vector.load %arg2[%c0_17, %c3, %c0_18, %c0_19, %c0_20] : memref<1x4x9x9x4xbf16, #tpu.memory_space<vmem>>, vector<1x1x8x8x4xbf16>
    %9 = vector.shape_cast %8 : vector<1x1x8x8x4xbf16> to vector<8x8x4xbf16>
    %c0_21 = arith.constant 0 : index
    %c2_22 = arith.constant 2 : index
    %c0_23 = arith.constant 0 : index
    %c1_24 = arith.constant 1 : index
    %c0_25 = arith.constant 0 : index
    %10 = vector.load %arg2[%c0_21, %c2_22, %c0_23, %c1_24, %c0_25] : memref<1x4x9x9x4xbf16, #tpu.memory_space<vmem>>, vector<1x1x8x8x4xbf16>
    %11 = vector.shape_cast %10 : vector<1x1x8x8x4xbf16> to vector<8x8x4xbf16>
    %c0_26 = arith.constant 0 : index
    %c0_27 = arith.constant 0 : index
    %c1_28 = arith.constant 1 : index
    %c0_29 = arith.constant 0 : index
    %c0_30 = arith.constant 0 : index
    %12 = vector.load %arg2[%c0_26, %c0_27, %c1_28, %c0_29, %c0_30] : memref<1x4x9x9x4xbf16, #tpu.memory_space<vmem>>, vector<1x1x8x8x4xbf16>
    %13 = vector.shape_cast %12 : vector<1x1x8x8x4xbf16> to vector<8x8x4xbf16>
    %c0_31 = arith.constant 0 : index
    %c1_32 = arith.constant 1 : index
    %c1_33 = arith.constant 1 : index
    %c0_34 = arith.constant 0 : index
    %c0_35 = arith.constant 0 : index
    %14 = vector.load %arg2[%c0_31, %c1_32, %c1_33, %c0_34, %c0_35] : memref<1x4x9x9x4xbf16, #tpu.memory_space<vmem>>, vector<1x1x8x8x4xbf16>
    %15 = vector.shape_cast %14 : vector<1x1x8x8x4xbf16> to vector<8x8x4xbf16>
    %c0_36 = arith.constant 0 : index
    %c0_37 = arith.constant 0 : index
    %c1_38 = arith.constant 1 : index
    %c1_39 = arith.constant 1 : index
    %c0_40 = arith.constant 0 : index
    %16 = vector.load %arg2[%c0_36, %c0_37, %c1_38, %c1_39, %c0_40] : memref<1x4x9x9x4xbf16, #tpu.memory_space<vmem>>, vector<1x1x8x8x4xbf16>
    %17 = vector.shape_cast %16 : vector<1x1x8x8x4xbf16> to vector<8x8x4xbf16>
    %18 = tpu.concatenate %1, %3, %5, %7, %9, %11, %13, %15, %17 in 2 : vector<8x8x4xbf16>, vector<8x8x4xbf16>, vector<8x8x4xbf16>, vector<8x8x4xbf16>, vector<8x8x4xbf16>, vector<8x8x4xbf16>, vector<8x8x4xbf16>, vector<8x8x4xbf16>, vector<8x8x4xbf16> -> vector<8x8x36xbf16>
    %19 = vector.shape_cast %18 : vector<8x8x36xbf16> to vector<64x36xbf16>
    %20 = vector.shape_cast %9 : vector<8x8x4xbf16> to vector<64x4xbf16>
    %c0_41 = arith.constant 0 : index
    %c0_42 = arith.constant 0 : index
    %21 = vector.load %arg3[%c0_41, %c0_42] : memref<36x8xbf16, #tpu.memory_space<vmem>>, vector<36x8xbf16>
    %cst = arith.constant dense<0.000000e+00> : vector<64x8xf32>
    %22 = tpu.matmul %19, %21, %cst {dimension_numbers = #tpu.dot_dimension_numbers<[1], [0], [0], [1], [0, 0, 1, 1], [], []>} : vector<64x36xbf16>, vector<36x8xbf16>, vector<64x8xf32> -> vector<64x8xf32>
    %c0_43 = arith.constant 0 : index
    %c0_44 = arith.constant 0 : index
    %23 = vector.load %arg4[%c0_43, %c0_44] : memref<4x8xbf16, #tpu.memory_space<vmem>>, vector<4x8xbf16>
    %cst_45 = arith.constant dense<0.000000e+00> : vector<64x8xf32>
    %24 = tpu.matmul %20, %23, %cst_45 {dimension_numbers = #tpu.dot_dimension_numbers<[1], [0], [0], [1], [0, 0, 1, 1], [], []>} : vector<64x4xbf16>, vector<4x8xbf16>, vector<64x8xf32> -> vector<64x8xf32>
    %25 = arith.truncf %22 : vector<64x8xf32> to vector<64x8xbf16>
    %c0_46 = arith.constant 0 : index
    %c0_47 = arith.constant 0 : index
    %c0_48 = arith.constant 0 : index
    %26 = vector.load %arg5[%c0_46, %c0_47, %c0_48] : memref<1x64x8xbf16, #tpu.memory_space<vmem>>, vector<1x64x8xbf16>
    %27 = vector.shape_cast %26 : vector<1x64x8xbf16> to vector<64x8xbf16>
    %28 = vector.shape_cast %25 : vector<64x8xbf16> to vector<1x64x8xbf16>
    tpu.vector_store %arg5[%c0_46, %c0_47, %c0_48], %28 {strides = array<i32>} : memref<1x64x8xbf16, #tpu.memory_space<vmem>>, vector<1x64x8xbf16>,
    %29 = arith.truncf %24 : vector<64x8xf32> to vector<64x8xbf16>
    %c0_49 = arith.constant 0 : index
    %c0_50 = arith.constant 0 : index
    %c0_51 = arith.constant 0 : index
    %30 = vector.load %arg6[%c0_49, %c0_50, %c0_51] : memref<1x64x8xbf16, #tpu.memory_space<vmem>>, vector<1x64x8xbf16>
    %31 = vector.shape_cast %30 : vector<1x64x8xbf16> to vector<64x8xbf16>
    %32 = vector.shape_cast %29 : vector<64x8xbf16> to vector<1x64x8xbf16>
    tpu.vector_store %arg6[%c0_49, %c0_50, %c0_51], %32 {strides = array<i32>} : memref<1x64x8xbf16, #tpu.memory_space<vmem>>, vector<1x64x8xbf16>,
    %cst_52 = arith.constant dense<0.000000e+00> : vector<8xf32>
    %33 = vector.multi_reduction <add>, %22, %cst_52 [0] : vector<64x8xf32> to vector<8xf32>
    %34 = vector.shape_cast %33 : vector<8xf32> to vector<1x8xf32>
    %35 = arith.mulf %22, %22 : vector<64x8xf32>
    %cst_53 = arith.constant dense<0.000000e+00> : vector<8xf32>
    %36 = vector.multi_reduction <add>, %35, %cst_53 [0] : vector<64x8xf32> to vector<8xf32>
    %37 = vector.shape_cast %36 : vector<8xf32> to vector<1x8xf32>
    %cst_54 = arith.constant dense<0.000000e+00> : vector<8xf32>
    %38 = vector.multi_reduction <add>, %24, %cst_54 [0] : vector<64x8xf32> to vector<8xf32>
    %39 = vector.shape_cast %38 : vector<8xf32> to vector<1x8xf32>
    %40 = arith.mulf %24, %24 : vector<64x8xf32>
    %cst_55 = arith.constant dense<0.000000e+00> : vector<8xf32>
    %41 = vector.multi_reduction <add>, %40, %cst_55 [0] : vector<64x8xf32> to vector<8xf32>
    %42 = vector.shape_cast %41 : vector<8xf32> to vector<1x8xf32>
    %43 = tpu.concatenate %34, %37, %39, %42 in 0 : vector<1x8xf32>, vector<1x8xf32>, vector<1x8xf32>, vector<1x8xf32> -> vector<4x8xf32>
    %c0_56 = arith.constant 0 : index
    %c0_57 = arith.constant 0 : index
    %c0_58 = arith.constant 0 : index
    %44 = vector.load %arg7[%c0_56, %c0_57, %c0_58] : memref<1x4x8xf32, #tpu.memory_space<vmem>>, vector<1x4x8xf32>
    %45 = vector.shape_cast %44 : vector<1x4x8xf32> to vector<4x8xf32>
    %46 = vector.shape_cast %43 : vector<4x8xf32> to vector<1x4x8xf32>
    tpu.vector_store %arg7[%c0_56, %c0_57, %c0_58], %46 {strides = array<i32>} : memref<1x4x8xf32, #tpu.memory_space<vmem>>, vector<1x4x8xf32>,
    return
  }
  func.func @transform_0(%arg0: i32, %arg1: i32) -> (i32, i32, i32, i32, i32) {
    %c0_i32 = arith.constant 0 : i32
    %c0_i32_0 = arith.constant 0 : i32
    %c0_i32_1 = arith.constant 0 : i32
    %c0_i32_2 = arith.constant 0 : i32
    %c0_i32_3 = arith.constant 0 : i32
    return %arg0, %c0_i32, %c0_i32_0, %c0_i32_1, %c0_i32_2 : i32, i32, i32, i32, i32
  }
  func.func @transform_1(%arg0: i32, %arg1: i32) -> (i32, i32) {
    %c0_i32 = arith.constant 0 : i32
    %c0_i32_0 = arith.constant 0 : i32
    return %c0_i32, %arg1 : i32, i32
  }
  func.func @transform_2(%arg0: i32, %arg1: i32) -> (i32, i32) {
    %c0_i32 = arith.constant 0 : i32
    %c0_i32_0 = arith.constant 0 : i32
    return %c0_i32, %arg1 : i32, i32
  }
  func.func @transform_3(%arg0: i32, %arg1: i32) -> (i32, i32, i32) {
    %c0_i32 = arith.constant 0 : i32
    %c0_i32_0 = arith.constant 0 : i32
    return %arg0, %c0_i32, %arg1 : i32, i32, i32
  }
  func.func @transform_4(%arg0: i32, %arg1: i32) -> (i32, i32, i32) {
    %c0_i32 = arith.constant 0 : i32
    %c0_i32_0 = arith.constant 0 : i32
    return %arg0, %c0_i32, %arg1 : i32, i32, i32
  }
  func.func @transform_5(%arg0: i32, %arg1: i32) -> (i32, i32, i32) {
    %c0_i32 = arith.constant 0 : i32
    %c0_i32_0 = arith.constant 0 : i32
    return %arg0, %c0_i32, %arg1 : i32, i32, i32
  }
}

module attributes {stable_mosaic.version = 11 : i64} {
  func.func @_stage2_kernel(%arg0: i32, %arg1: i32, %arg2: memref<1x1x10x10x8xbf16, #tpu.memory_space<vmem>>, %arg3: memref<1x10x10x1xf32, #tpu.memory_space<vmem>>, %arg4: memref<2x8xf32, #tpu.memory_space<vmem>>, %arg5: memref<72x8xbf16, #tpu.memory_space<vmem>>, %arg6: memref<1x64x8xbf16, #tpu.memory_space<vmem>>, %arg7: memref<1x2x8xf32, #tpu.memory_space<vmem>>) attributes {dimension_semantics = [#tpu.dimension_semantics<parallel>, #tpu.dimension_semantics<parallel>], iteration_bounds = array<i64: 2, 1>, scalar_prefetch = 0 : i64, scratch_operands = 0 : i64, tpu.core_type = #tpu.core_type<tc>, window_params = [{transform_indices = @transform_0, window_bounds = array<i64: 1, 1, 10, 10, 8>}, {pipeline_mode = #tpu.pipeline_mode<synchronous>, transform_indices = @transform_1, window_bounds = array<i64: 1, 10, 10, 1>}, {pipeline_mode = #tpu.pipeline_mode<synchronous>, transform_indices = @transform_2, window_bounds = array<i64: 2, 8>}, {transform_indices = @transform_3, window_bounds = array<i64: 72, 8>}, {transform_indices = @transform_4, window_bounds = array<i64: 1, 64, 8>}, {transform_indices = @transform_5, window_bounds = array<i64: 1, 2, 8>}]} {
    %c0 = arith.constant 0 : index
    %c0_0 = arith.constant 0 : index
    %0 = vector.load %arg4[%c0, %c0_0] : memref<2x8xf32, #tpu.memory_space<vmem>>, vector<2x8xf32>
    %1 = vector.extract_strided_slice %0 {offsets = [0, 0], sizes = [1, 8], strides = [1, 1]} : vector<2x8xf32> to vector<1x8xf32>
    %2 = vector.extract_strided_slice %0 {offsets = [1, 0], sizes = [1, 8], strides = [1, 1]} : vector<2x8xf32> to vector<1x8xf32>
    %c0_1 = arith.constant 0 : index
    %c0_2 = arith.constant 0 : index
    %c0_3 = arith.constant 0 : index
    %c0_4 = arith.constant 0 : index
    %c0_5 = arith.constant 0 : index
    %3 = vector.load %arg2[%c0_1, %c0_2, %c0_3, %c0_4, %c0_5] : memref<1x1x10x10x8xbf16, #tpu.memory_space<vmem>>, vector<1x1x10x10x8xbf16>
    %4 = vector.shape_cast %3 : vector<1x1x10x10x8xbf16> to vector<1x10x10x8xbf16>
    %5 = arith.extf %4 : vector<1x10x10x8xbf16> to vector<1x10x10x8xf32>
    %6 = vector.shape_cast %1 : vector<1x8xf32> to vector<1x1x1x8xf32>
    %7 = vector.broadcast %6 : vector<1x1x1x8xf32> to vector<1x10x10x8xf32>
    %8 = arith.mulf %5, %7 : vector<1x10x10x8xf32>
    %9 = vector.shape_cast %2 : vector<1x8xf32> to vector<1x1x1x8xf32>
    %10 = vector.broadcast %9 : vector<1x1x1x8xf32> to vector<1x10x10x8xf32>
    %11 = arith.addf %8, %10 : vector<1x10x10x8xf32>
    %cst = arith.constant 0.000000e+00 : f32
    %12 = vector.broadcast %cst : f32 to vector<1x10x10x8xf32>
    %13 = arith.maximumf %11, %12 : vector<1x10x10x8xf32>
    %c0_6 = arith.constant 0 : index
    %c0_7 = arith.constant 0 : index
    %c0_8 = arith.constant 0 : index
    %c0_9 = arith.constant 0 : index
    %14 = vector.load %arg3[%c0_6, %c0_7, %c0_8, %c0_9] : memref<1x10x10x1xf32, #tpu.memory_space<vmem>>, vector<1x10x10x1xf32>
    %15 = vector.broadcast %14 : vector<1x10x10x1xf32> to vector<1x10x10x8xf32>
    %16 = arith.mulf %13, %15 : vector<1x10x10x8xf32>
    %17 = arith.truncf %16 : vector<1x10x10x8xf32> to vector<1x10x10x8xbf16>
    %18 = vector.extract_strided_slice %17 {offsets = [0, 0, 0, 0], sizes = [1, 8, 8, 8], strides = [1, 1, 1, 1]} : vector<1x10x10x8xbf16> to vector<1x8x8x8xbf16>
    %19 = vector.shape_cast %18 : vector<1x8x8x8xbf16> to vector<8x8x8xbf16>
    %20 = vector.extract_strided_slice %17 {offsets = [0, 0, 1, 0], sizes = [1, 8, 8, 8], strides = [1, 1, 1, 1]} : vector<1x10x10x8xbf16> to vector<1x8x8x8xbf16>
    %21 = vector.shape_cast %20 : vector<1x8x8x8xbf16> to vector<8x8x8xbf16>
    %22 = vector.extract_strided_slice %17 {offsets = [0, 0, 2, 0], sizes = [1, 8, 8, 8], strides = [1, 1, 1, 1]} : vector<1x10x10x8xbf16> to vector<1x8x8x8xbf16>
    %23 = vector.shape_cast %22 : vector<1x8x8x8xbf16> to vector<8x8x8xbf16>
    %24 = vector.extract_strided_slice %17 {offsets = [0, 1, 0, 0], sizes = [1, 8, 8, 8], strides = [1, 1, 1, 1]} : vector<1x10x10x8xbf16> to vector<1x8x8x8xbf16>
    %25 = vector.shape_cast %24 : vector<1x8x8x8xbf16> to vector<8x8x8xbf16>
    %26 = vector.extract_strided_slice %17 {offsets = [0, 1, 1, 0], sizes = [1, 8, 8, 8], strides = [1, 1, 1, 1]} : vector<1x10x10x8xbf16> to vector<1x8x8x8xbf16>
    %27 = vector.shape_cast %26 : vector<1x8x8x8xbf16> to vector<8x8x8xbf16>
    %28 = vector.extract_strided_slice %17 {offsets = [0, 1, 2, 0], sizes = [1, 8, 8, 8], strides = [1, 1, 1, 1]} : vector<1x10x10x8xbf16> to vector<1x8x8x8xbf16>
    %29 = vector.shape_cast %28 : vector<1x8x8x8xbf16> to vector<8x8x8xbf16>
    %30 = vector.extract_strided_slice %17 {offsets = [0, 2, 0, 0], sizes = [1, 8, 8, 8], strides = [1, 1, 1, 1]} : vector<1x10x10x8xbf16> to vector<1x8x8x8xbf16>
    %31 = vector.shape_cast %30 : vector<1x8x8x8xbf16> to vector<8x8x8xbf16>
    %32 = vector.extract_strided_slice %17 {offsets = [0, 2, 1, 0], sizes = [1, 8, 8, 8], strides = [1, 1, 1, 1]} : vector<1x10x10x8xbf16> to vector<1x8x8x8xbf16>
    %33 = vector.shape_cast %32 : vector<1x8x8x8xbf16> to vector<8x8x8xbf16>
    %34 = vector.extract_strided_slice %17 {offsets = [0, 2, 2, 0], sizes = [1, 8, 8, 8], strides = [1, 1, 1, 1]} : vector<1x10x10x8xbf16> to vector<1x8x8x8xbf16>
    %35 = vector.shape_cast %34 : vector<1x8x8x8xbf16> to vector<8x8x8xbf16>
    %36 = tpu.concatenate %19, %21, %23, %25, %27, %29, %31, %33, %35 in 2 : vector<8x8x8xbf16>, vector<8x8x8xbf16>, vector<8x8x8xbf16>, vector<8x8x8xbf16>, vector<8x8x8xbf16>, vector<8x8x8xbf16>, vector<8x8x8xbf16>, vector<8x8x8xbf16>, vector<8x8x8xbf16> -> vector<8x8x72xbf16>
    %37 = vector.shape_cast %36 : vector<8x8x72xbf16> to vector<64x72xbf16>
    %c0_10 = arith.constant 0 : index
    %c0_11 = arith.constant 0 : index
    %38 = vector.load %arg5[%c0_10, %c0_11] : memref<72x8xbf16, #tpu.memory_space<vmem>>, vector<72x8xbf16>
    %cst_12 = arith.constant dense<0.000000e+00> : vector<64x8xf32>
    %39 = tpu.matmul %37, %38, %cst_12 {dimension_numbers = #tpu.dot_dimension_numbers<[1], [0], [0], [1], [0, 0, 1, 1], [], []>} : vector<64x72xbf16>, vector<72x8xbf16>, vector<64x8xf32> -> vector<64x8xf32>
    %40 = arith.truncf %39 : vector<64x8xf32> to vector<64x8xbf16>
    %c0_13 = arith.constant 0 : index
    %c0_14 = arith.constant 0 : index
    %c0_15 = arith.constant 0 : index
    %41 = vector.load %arg6[%c0_13, %c0_14, %c0_15] : memref<1x64x8xbf16, #tpu.memory_space<vmem>>, vector<1x64x8xbf16>
    %42 = vector.shape_cast %41 : vector<1x64x8xbf16> to vector<64x8xbf16>
    %43 = vector.shape_cast %40 : vector<64x8xbf16> to vector<1x64x8xbf16>
    tpu.vector_store %arg6[%c0_13, %c0_14, %c0_15], %43 {strides = array<i32>} : memref<1x64x8xbf16, #tpu.memory_space<vmem>>, vector<1x64x8xbf16>,
    %cst_16 = arith.constant dense<0.000000e+00> : vector<8xf32>
    %44 = vector.multi_reduction <add>, %39, %cst_16 [0] : vector<64x8xf32> to vector<8xf32>
    %45 = vector.shape_cast %44 : vector<8xf32> to vector<1x8xf32>
    %46 = arith.mulf %39, %39 : vector<64x8xf32>
    %cst_17 = arith.constant dense<0.000000e+00> : vector<8xf32>
    %47 = vector.multi_reduction <add>, %46, %cst_17 [0] : vector<64x8xf32> to vector<8xf32>
    %48 = vector.shape_cast %47 : vector<8xf32> to vector<1x8xf32>
    %49 = tpu.concatenate %45, %48 in 0 : vector<1x8xf32>, vector<1x8xf32> -> vector<2x8xf32>
    %c0_18 = arith.constant 0 : index
    %c0_19 = arith.constant 0 : index
    %c0_20 = arith.constant 0 : index
    %50 = vector.load %arg7[%c0_18, %c0_19, %c0_20] : memref<1x2x8xf32, #tpu.memory_space<vmem>>, vector<1x2x8xf32>
    %51 = vector.shape_cast %50 : vector<1x2x8xf32> to vector<2x8xf32>
    %52 = vector.shape_cast %49 : vector<2x8xf32> to vector<1x2x8xf32>
    tpu.vector_store %arg7[%c0_18, %c0_19, %c0_20], %52 {strides = array<i32>} : memref<1x2x8xf32, #tpu.memory_space<vmem>>, vector<1x2x8xf32>,
    return
  }
  func.func @transform_0(%arg0: i32, %arg1: i32) -> (i32, i32, i32, i32, i32) {
    %c0_i32 = arith.constant 0 : i32
    %c0_i32_0 = arith.constant 0 : i32
    %c0_i32_1 = arith.constant 0 : i32
    %c0_i32_2 = arith.constant 0 : i32
    %c0_i32_3 = arith.constant 0 : i32
    return %arg0, %c0_i32, %c0_i32_0, %c0_i32_1, %c0_i32_2 : i32, i32, i32, i32, i32
  }
  func.func @transform_1(%arg0: i32, %arg1: i32) -> (i32, i32, i32, i32) {
    %c0_i32 = arith.constant 0 : i32
    %c0_i32_0 = arith.constant 0 : i32
    %c0_i32_1 = arith.constant 0 : i32
    %c0_i32_2 = arith.constant 0 : i32
    %c0_i32_3 = arith.constant 0 : i32
    return %c0_i32, %c0_i32_0, %c0_i32_1, %c0_i32_2 : i32, i32, i32, i32
  }
  func.func @transform_2(%arg0: i32, %arg1: i32) -> (i32, i32) {
    %c0_i32 = arith.constant 0 : i32
    %c0_i32_0 = arith.constant 0 : i32
    %c0_i32_1 = arith.constant 0 : i32
    return %c0_i32, %c0_i32_0 : i32, i32
  }
  func.func @transform_3(%arg0: i32, %arg1: i32) -> (i32, i32) {
    %c0_i32 = arith.constant 0 : i32
    %c0_i32_0 = arith.constant 0 : i32
    return %c0_i32, %arg1 : i32, i32
  }
  func.func @transform_4(%arg0: i32, %arg1: i32) -> (i32, i32, i32) {
    %c0_i32 = arith.constant 0 : i32
    %c0_i32_0 = arith.constant 0 : i32
    return %arg0, %c0_i32, %arg1 : i32, i32, i32
  }
  func.func @transform_5(%arg0: i32, %arg1: i32) -> (i32, i32, i32) {
    %c0_i32 = arith.constant 0 : i32
    %c0_i32_0 = arith.constant 0 : i32
    return %arg0, %c0_i32, %arg1 : i32, i32, i32
  }
}

module attributes {stable_mosaic.version = 11 : i64} {
  func.func @_finalize_kernel(%arg0: i32, %arg1: memref<1x64x8xbf16, #tpu.memory_space<vmem>>, %arg2: memref<1x64x8xbf16, #tpu.memory_space<vmem>>, %arg3: memref<3x8xf32, #tpu.memory_space<vmem>>, %arg4: memref<1x8x64xf32, #tpu.memory_space<vmem>>) attributes {dimension_semantics = [#tpu.dimension_semantics<parallel>], iteration_bounds = array<i64: 2>, scalar_prefetch = 0 : i64, scratch_operands = 0 : i64, tpu.core_type = #tpu.core_type<tc>, window_params = [{transform_indices = @transform_0, window_bounds = array<i64: 1, 64, 8>}, {transform_indices = @transform_1, window_bounds = array<i64: 1, 64, 8>}, {pipeline_mode = #tpu.pipeline_mode<synchronous>, transform_indices = @transform_2, window_bounds = array<i64: 3, 8>}, {transform_indices = @transform_3, window_bounds = array<i64: 1, 8, 64>}]} {
    %c0 = arith.constant 0 : index
    %c0_0 = arith.constant 0 : index
    %0 = vector.load %arg3[%c0, %c0_0] : memref<3x8xf32, #tpu.memory_space<vmem>>, vector<3x8xf32>
    %1 = vector.extract_strided_slice %0 {offsets = [0, 0], sizes = [1, 8], strides = [1, 1]} : vector<3x8xf32> to vector<1x8xf32>
    %2 = vector.extract_strided_slice %0 {offsets = [1, 0], sizes = [1, 8], strides = [1, 1]} : vector<3x8xf32> to vector<1x8xf32>
    %3 = vector.extract_strided_slice %0 {offsets = [2, 0], sizes = [1, 8], strides = [1, 1]} : vector<3x8xf32> to vector<1x8xf32>
    %c0_1 = arith.constant 0 : index
    %c0_2 = arith.constant 0 : index
    %c0_3 = arith.constant 0 : index
    %4 = vector.load %arg1[%c0_1, %c0_2, %c0_3] : memref<1x64x8xbf16, #tpu.memory_space<vmem>>, vector<1x64x8xbf16>
    %5 = vector.shape_cast %4 : vector<1x64x8xbf16> to vector<64x8xbf16>
    %6 = arith.extf %5 : vector<64x8xbf16> to vector<64x8xf32>
    %7 = vector.broadcast %1 : vector<1x8xf32> to vector<64x8xf32>
    %8 = arith.mulf %6, %7 : vector<64x8xf32>
    %c0_4 = arith.constant 0 : index
    %c0_5 = arith.constant 0 : index
    %c0_6 = arith.constant 0 : index
    %9 = vector.load %arg2[%c0_4, %c0_5, %c0_6] : memref<1x64x8xbf16, #tpu.memory_space<vmem>>, vector<1x64x8xbf16>
    %10 = vector.shape_cast %9 : vector<1x64x8xbf16> to vector<64x8xbf16>
    %11 = arith.extf %10 : vector<64x8xbf16> to vector<64x8xf32>
    %12 = vector.broadcast %2 : vector<1x8xf32> to vector<64x8xf32>
    %13 = arith.mulf %11, %12 : vector<64x8xf32>
    %14 = arith.addf %8, %13 : vector<64x8xf32>
    %15 = vector.broadcast %3 : vector<1x8xf32> to vector<64x8xf32>
    %16 = arith.addf %14, %15 : vector<64x8xf32>
    %cst = arith.constant 0.000000e+00 : f32
    %17 = vector.broadcast %cst : f32 to vector<64x8xf32>
    %18 = arith.maximumf %16, %17 : vector<64x8xf32>
    %19 = tpu.transpose %18, [1, 0] : vector<64x8xf32> -> vector<8x64xf32>
    %c0_7 = arith.constant 0 : index
    %c0_8 = arith.constant 0 : index
    %c0_9 = arith.constant 0 : index
    %20 = vector.load %arg4[%c0_7, %c0_8, %c0_9] : memref<1x8x64xf32, #tpu.memory_space<vmem>>, vector<1x8x64xf32>
    %21 = vector.shape_cast %20 : vector<1x8x64xf32> to vector<8x64xf32>
    %22 = vector.shape_cast %19 : vector<8x64xf32> to vector<1x8x64xf32>
    tpu.vector_store %arg4[%c0_7, %c0_8, %c0_9], %22 {strides = array<i32>} : memref<1x8x64xf32, #tpu.memory_space<vmem>>, vector<1x8x64xf32>,
    return
  }
  func.func @transform_0(%arg0: i32) -> (i32, i32, i32) {
    %c0_i32 = arith.constant 0 : i32
    %c0_i32_0 = arith.constant 0 : i32
    %c0_i32_1 = arith.constant 0 : i32
    return %arg0, %c0_i32, %c0_i32_0 : i32, i32, i32
  }
  func.func @transform_1(%arg0: i32) -> (i32, i32, i32) {
    %c0_i32 = arith.constant 0 : i32
    %c0_i32_0 = arith.constant 0 : i32
    %c0_i32_1 = arith.constant 0 : i32
    return %arg0, %c0_i32, %c0_i32_0 : i32, i32, i32
  }
  func.func @transform_2(%arg0: i32) -> (i32, i32) {
    %c0_i32 = arith.constant 0 : i32
    %c0_i32_0 = arith.constant 0 : i32
    %c0_i32_1 = arith.constant 0 : i32
    return %c0_i32, %c0_i32_0 : i32, i32
  }
  func.func @transform_3(%arg0: i32) -> (i32, i32, i32) {
    %c0_i32 = arith.constant 0 : i32
    %c0_i32_0 = arith.constant 0 : i32
    %c0_i32_1 = arith.constant 0 : i32
    return %arg0, %c0_i32, %c0_i32_0 : i32, i32, i32
  }
}

</mosaic_0001>

<llo_original>
// kernel: _lambda_.5
$region0: #{_lambda_.5}
  #allocation0 [shape = 'u32[]', space=smem, size = 0x4, offset = 0x4, fixed_abs, tag = 'smem constant byte address 0x4 - core index']
  #allocation1 [shape = 'u32[72,128]{1,0:T(1,128)}', space=vmem, size = 0x9000, scoped, tag = 'internal scratch']
  %s0 = inlined_call_operand.vmem [shape: bf16[2,64,8], index: 0, kind: input, shape index: {}]
  %s1 = inlined_call_operand.vmem [shape: bf16[2,64,8], index: 1, kind: input, shape index: {}]
  %s2 = inlined_call_operand.vmem [shape: f32[3,8], index: 2, kind: input, shape index: {}]
  %s3 = inlined_call_operand.vmem [shape: f32[2,8,64], index: 3, kind: output, shape index: {}]
  %s4 = sld [smem:[#allocation0]]
  $region45: #{_lambda_.5} parent=0
    _
  %s6 = ssub.s32 1, %s4
  %s7 = scalar_select 0, %s6, %s4
  loop: start=0, step=1, limit=4
  $region2: #{_lambda_.5} parent=0 // loop_pre_header
    _
  $region3: #{_lambda_.5} parent=0 // loop_header
    %s9 = sphi 0, %s13
    %p10 = scmp.ge.s32.totalorder %s9, 4
    %s19 = sphi 0, %s21
    %s22 = sphi 0, %s19
    %s23 = sphi 0, %s22
    %s39 = sphi 0, %s23
    %s45 = sphi 0, %s47
    %s48 = sphi 0, %s45
    %s49 = sphi 0, %s48
    %s65 = sphi 0, %s49
    %s69 = sphi 0, %s69
    %s71 = sphi 0, %s69
    %s72 = sphi 0, %s71
    %s86 = sphi 0, %s72
    %s92 = sphi 0, %s94
    %s95 = sphi 0, %s92
    %s96 = sphi 0, %s95
    %s112 = sphi 0, %s96
  $region4: #{_lambda_.5} parent=0 // loop_header_branch
    %12 = sbr.rel (%p10) target = $region8
  $region5: #{_lambda_.5} parent=0 // loop_body
    %s14 = ssub.s32 %s9, 1
    %s15 = ssub.s32 %s9, 2
    %s16 = sadd.s32 %s9, 1
    %s17 = ssub.s32 %s9, %s16
    %p18 = scmp.eq.s32.totalorder %s17, 0
    %s20 = sadd.s32 %s19, 1
    %s21 = scalar_select %p18, %s19, %s20
    %p24 = pneg %p18
    %p25 = scmp.eq.s32.totalorder %s9, 1
    %p26 = por %p24, %p25
    %p27 = scmp.ne.s32.totalorder %s19, %s22
    %p28 = scmp.eq.s32.totalorder %s9, 0
    %p29 = por %p27, %p28
    %p30 = scmp.ne.s32.totalorder %s19, %s22
    %p31 = scmp.eq.s32.totalorder %s14, 1
    %p32 = por %p30, %p31
    %p33 = scmp.ne.s32.totalorder %s22, %s23
    %p34 = scmp.eq.s32.totalorder %s14, 0
    %p35 = por %p33, %p34
    %p36 = scmp.ne.s32.totalorder %s22, %s23
    %p37 = scmp.eq.s32.totalorder %s15, 1
    %p38 = por %p36, %p37
    %p40 = scmp.ne.s32.totalorder %s23, %s39
    %p41 = scmp.eq.s32.totalorder %s15, 0
    %p42 = por %p40, %p41
    %s43 = ssub.s32 %s9, %s16
    %p44 = scmp.eq.s32.totalorder %s43, 0
    %s46 = sadd.s32 %s45, 1
    %s47 = scalar_select %p44, %s45, %s46
    %p50 = pneg %p44
    %p51 = scmp.eq.s32.totalorder %s9, 1
    %p52 = por %p50, %p51
    %p53 = scmp.ne.s32.totalorder %s45, %s48
    %p54 = scmp.eq.s32.totalorder %s9, 0
    %p55 = por %p53, %p54
    %p56 = scmp.ne.s32.totalorder %s45, %s48
    %p57 = scmp.eq.s32.totalorder %s14, 1
    %p58 = por %p56, %p57
    %p59 = scmp.ne.s32.totalorder %s48, %s49
    %p60 = scmp.eq.s32.totalorder %s14, 0
    %p61 = por %p59, %p60
    %p62 = scmp.ne.s32.totalorder %s48, %s49
    %p63 = scmp.eq.s32.totalorder %s15, 1
    %p64 = por %p62, %p63
    %p66 = scmp.ne.s32.totalorder %s49, %s65
    %p67 = scmp.eq.s32.totalorder %s15, 0
    %p68 = por %p66, %p67
    %s70 = sadd.s32 %s69, 1
    %p73 = scmp.eq.s32.totalorder %s9, 1
    %p74 = scmp.ne.s32.totalorder %s69, %s71
    %p75 = scmp.eq.s32.totalorder %s9, 0
    %p76 = por %p74, %p75
    %p77 = scmp.ne.s32.totalorder %s69, %s71
    %p78 = scmp.eq.s32.totalorder %s14, 1
    %p79 = por %p77, %p78
    %p80 = scmp.ne.s32.totalorder %s71, %s72
    %p81 = scmp.eq.s32.totalorder %s14, 0
    %p82 = por %p80, %p81
    %p83 = scmp.ne.s32.totalorder %s71, %s72
    %p84 = scmp.eq.s32.totalorder %s15, 1
    %p85 = por %p83, %p84
    %p87 = scmp.ne.s32.totalorder %s72, %s86
    %p88 = scmp.eq.s32.totalorder %s15, 0
    %p89 = por %p87, %p88
    %s90 = ssub.s32 %s9, %s16
    %p91 = scmp.eq.s32.totalorder %s90, 0
    %s93 = sadd.s32 %s92, 1
    %s94 = scalar_select %p91, %s92, %s93
    %p97 = pneg %p91
    %p98 = scmp.eq.s32.totalorder %s9, 1
    %p99 = por %p97, %p98
    %p100 = scmp.ne.s32.totalorder %s92, %s95
    %p101 = scmp.eq.s32.totalorder %s9, 0
    %p102 = por %p100, %p101
    %p103 = scmp.ne.s32.totalorder %s92, %s95
    %p104 = scmp.eq.s32.totalorder %s14, 1
    %p105 = por %p103, %p104
    %p106 = scmp.ne.s32.totalorder %s95, %s96
    %p107 = scmp.eq.s32.totalorder %s14, 0
    %p108 = por %p106, %p107
    %p109 = scmp.ne.s32.totalorder %s95, %s96
    %p110 = scmp.eq.s32.totalorder %s15, 1
    %p111 = por %p109, %p110
    %p113 = scmp.ne.s32.totalorder %s96, %s112
    %p114 = scmp.eq.s32.totalorder %s15, 0
    %p115 = por %p113, %p114
    %p116 = scmp.le.s32.totalorder 1, %s9
    %p117 = scmp.lt.s32.totalorder %s9, 3
    %p118 = pnand %p116, %p117
    %p119 = pneg %p118
    // Predicated region
    $region9: #{_lambda_.5} parent=5 // pred_check
      _
    $region10: #{_lambda_.5} parent=5 // pred_check_branch
      %121 = sbr.rel (%p118) target = $region12
    $region11: #{_lambda_.5} parent=5 // pred_region
      %s122 = ssub.s32 %s9, 1
      // Predicated region
      $region13: #{_lambda_.5} parent=11 // pred_check
        %p123 = pneg %p82
      $region14: #{_lambda_.5} parent=11 // pred_check_branch
        %125 = sbr.rel (%p123) target = $region16
      $region15: #{_lambda_.5} parent=11 // pred_region
        _
      $region16: #{_lambda_.5} parent=11 // pred_fallthru
        _
    $region12: #{_lambda_.5} parent=5 // pred_fallthru
      _
    %p126 = scmp.lt.s32.totalorder %s9, 2
    // Predicated region
    $region17: #{_lambda_.5} parent=5 // pred_check
      %p127 = pneg %p126
    $region18: #{_lambda_.5} parent=5 // pred_check_branch
      %129 = sbr.rel (%p127) target = $region20
    $region19: #{_lambda_.5} parent=5 // pred_region
      // Predicated region
      $region21: #{_lambda_.5} parent=19 // pred_check
        %p130 = pneg %p29
      $region22: #{_lambda_.5} parent=19 // pred_check_branch
        %132 = sbr.rel (%p130) target = $region24
      $region23: #{_lambda_.5} parent=19 // pred_region
        %p133 = scmp.lt.s32.totalorder %s9, 1
        %s134 = scalar_select %p133, %s9, 1
        %s135 = smul.addr %s134, 8
        %s136 = smul.addr %s135, 4
        %s137 = scalar_lea.vmem %s0, %s136
      $region24: #{_lambda_.5} parent=19 // pred_fallthru
        _
      // Predicated region
      $region25: #{_lambda_.5} parent=19 // pred_check
        %p138 = pneg %p55
      $region26: #{_lambda_.5} parent=19 // pred_check_branch
        %140 = sbr.rel (%p138) target = $region28
      $region27: #{_lambda_.5} parent=19 // pred_region
        %p141 = scmp.lt.s32.totalorder %s9, 1
        %s142 = scalar_select %p141, %s9, 1
        %s143 = smul.addr %s142, 8
        %s144 = smul.addr %s143, 4
        %s145 = scalar_lea.vmem %s1, %s144
      $region28: #{_lambda_.5} parent=19 // pred_fallthru
        _
    $region20: #{_lambda_.5} parent=5 // pred_fallthru
      _
    %p146 = scmp.le.s32.totalorder 1, %s9
    %p147 = scmp.lt.s32.totalorder %s9, 3
    %p148 = pnand %p146, %p147
    %p149 = pneg %p148
    // Predicated region
    $region29: #{_lambda_.5} parent=5 // pred_check
      _
    $region30: #{_lambda_.5} parent=5 // pred_check_branch
      %151 = sbr.rel (%p148) target = $region32
    $region31: #{_lambda_.5} parent=5 // pred_region
      %s152 = ssub.s32 %s9, 1
      %p153 = scmp.lt.s32.totalorder %s14, 1
      %s154 = scalar_select %p153, %s14, 1
      %s155 = smul.addr %s154, 8
      %s156 = smul.addr %s155, 4
      %s157 = scalar_lea.vmem %s0, %s156
      %p158 = pneg %p35
      %p159 = pneg %p32
      %p160 = scmp.lt.s32.totalorder %s14, 1
      %s161 = scalar_select %p160, %s14, 1
      %s162 = smul.addr %s161, 8
      %s163 = smul.addr %s162, 4
      %s164 = scalar_lea.vmem %s1, %s163
      %p165 = pneg %p61
      %p166 = pneg %p58
      %p167 = pneg %p82
      %p168 = pneg %p79
      %p169 = pneg %p108
      %p170 = pneg %p105
      %p171 = scmp.lt.s32.totalorder %s14, 1
      %s172 = scalar_select %p171, %s14, 1
      %s173 = smul.addr %s172, 8
      %s174 = scalar_lea.vmem %s3, %s173
      %p175 = scmp.lt.s32.totalorder %s14, 1
      %s176 = scalar_select %p175, %s14, 1
      %s177 = smul.addr %s176, 8
      %s178 = smul.addr %s177, 4
      %s179 = scalar_lea.vmem %s0, %s178
      %p180 = scmp.lt.s32.totalorder %s14, 1
      %s181 = scalar_select %p180, %s14, 1
      %s182 = smul.addr %s181, 8
      %s183 = smul.addr %s182, 4
      %s184 = scalar_lea.vmem %s1, %s183
      %p185 = scmp.lt.s32.totalorder %s14, 1
      %s186 = scalar_select %p185, %s14, 1
      %s187 = smul.addr %s186, 8
      %s188 = scalar_lea.vmem %s3, %s187
      %v189 = vld [vmem:[%s2] sm:$0x7]
      %v190 = vld [vmem:[%s179] sm:$0xf]
      %v191 = vld [vmem:[%s179 + $0x4] sm:$0xf]
      %v192 = vld [vmem:[%s179 + $0x8] sm:$0xf]
      %v193 = vld [vmem:[%s179 + $0xc] sm:$0xf]
      %v194 = vld [vmem:[%s179 + $0x10] sm:$0xf]
      %v195 = vld [vmem:[%s179 + $0x14] sm:$0xf]
      %v196 = vld [vmem:[%s179 + $0x18] sm:$0xf]
      %v197 = vld [vmem:[%s179 + $0x1c] sm:$0xf]
      %v198 = vunpack.c.l.bf16 %v190
      %v199 = vunpack.c.l.bf16 %v191
      %v200 = vunpack.c.l.bf16 %v192
      %v201 = vunpack.c.l.bf16 %v193
      %v202 = vunpack.c.l.bf16 %v194
      %v203 = vunpack.c.l.bf16 %v195
      %v204 = vunpack.c.l.bf16 %v196
      %v205 = vunpack.c.l.bf16 %v197
      %v206 = vperm.slane %v189, 0
      %v207 = vmul.f32 %v198, %v206
      %v208 = vmul.f32 %v199, %v206
      %v209 = vmul.f32 %v200, %v206
      %v210 = vmul.f32 %v201, %v206
      %v211 = vmul.f32 %v202, %v206
      %v212 = vmul.f32 %v203, %v206
      %v213 = vmul.f32 %v204, %v206
      %v214 = vmul.f32 %v205, %v206
      %v215 = vld [vmem:[%s184] sm:$0xf]
      %v216 = vld [vmem:[%s184 + $0x4] sm:$0xf]
      %v217 = vld [vmem:[%s184 + $0x8] sm:$0xf]
      %v218 = vld [vmem:[%s184 + $0xc] sm:$0xf]
      %v219 = vld [vmem:[%s184 + $0x10] sm:$0xf]
      %v220 = vld [vmem:[%s184 + $0x14] sm:$0xf]
      %v221 = vld [vmem:[%s184 + $0x18] sm:$0xf]
      %v222 = vld [vmem:[%s184 + $0x1c] sm:$0xf]
      %v223 = vunpack.c.l.bf16 %v215
      %v224 = vunpack.c.l.bf16 %v216
      %v225 = vunpack.c.l.bf16 %v217
      %v226 = vunpack.c.l.bf16 %v218
      %v227 = vunpack.c.l.bf16 %v219
      %v228 = vunpack.c.l.bf16 %v220
      %v229 = vunpack.c.l.bf16 %v221
      %v230 = vunpack.c.l.bf16 %v222
      %v231 = vperm.slane %v189, 1
      %v232 = vmul.f32 %v223, %v231
      %v233 = vmul.f32 %v224, %v231
      %v234 = vmul.f32 %v225, %v231
      %v235 = vmul.f32 %v226, %v231
      %v236 = vmul.f32 %v227, %v231
      %v237 = vmul.f32 %v228, %v231
      %v238 = vmul.f32 %v229, %v231
      %v239 = vmul.f32 %v230, %v231
      %v240 = vadd.f32 %v207, %v232
      %v241 = vadd.f32 %v208, %v233
      %v242 = vadd.f32 %v209, %v234
      %v243 = vadd.f32 %v210, %v235
      %v244 = vadd.f32 %v211, %v236
      %v245 = vadd.f32 %v212, %v237
      %v246 = vadd.f32 %v213, %v238
      %v247 = vadd.f32 %v214, %v239
      %v248 = vperm.slane %v189, 2
      %v249 = vadd.f32 %v240, %v248
      %v250 = vadd.f32 %v241, %v248
      %v251 = vadd.f32 %v242, %v248
      %v252 = vadd.f32 %v243, %v248
      %v253 = vadd.f32 %v244, %v248
      %v254 = vadd.f32 %v245, %v248
      %v255 = vadd.f32 %v246, %v248
      %v256 = vadd.f32 %v247, %v248
      %v257 = vmax.f32 %v249, 0.0
      %v258 = vmax.f32 %v250, 0.0
      %v259 = vmax.f32 %v251, 0.0
      %v260 = vmax.f32 %v252, 0.0
      %v261 = vmax.f32 %v253, 0.0
      %v262 = vmax.f32 %v254, 0.0
      %v263 = vmax.f32 %v255, 0.0
      %v264 = vmax.f32 %v256, 0.0
      %265 = vxpose.xlu0.b32.start [1/16] %v257, 128
      %266 = vxpose.xlu0.b32.cont [2/16] %v258, 128
      %267 = vxpose.xlu0.b32.cont [3/16] %v259, 128
      %268 = vxpose.xlu0.b32.cont [4/16] %v260, 128
      %269 = vxpose.xlu0.b32.cont [5/16] %v261, 128
      %270 = vxpose.xlu0.b32.cont [6/16] %v262, 128
      %271 = vxpose.xlu0.b32.cont [7/16] %v263, 128
      %272 = vxpose.xlu0.b32.cont [8/16] %v264, 128
      %273 = vxpose.xlu0.b32.cont [9/16] 0.0, 128
      %274 = vxpose.xlu0.b32.cont [10/16] 0.0, 128
      %275 = vxpose.xlu0.b32.cont [11/16] 0.0, 128
      %276 = vxpose.xlu0.b32.cont [12/16] 0.0, 128
      %277 = vxpose.xlu0.b32.cont [13/16] 0.0, 128
      %278 = vxpose.xlu0.b32.cont [14/16] 0.0, 128
      %279 = vxpose.xlu0.b32.cont [15/16] 0.0, 128
      %280 = vxpose.xlu0.b32.end [16/16] 0.0, 128
      %v281 = vpop.trf.xlu0
      %v282 = vpop.trf.xlu0
      %v283 = vpop.trf.xlu0
      %v284 = vpop.trf.xlu0
      %v285 = vpop.trf.xlu0
      %v286 = vpop.trf.xlu0
      %v287 = vpop.trf.xlu0
      %v288 = vpop.trf.xlu0
      %v289 = vpop.trf.xlu0
      %v290 = vpop.trf.xlu0
      %v291 = vpop.trf.xlu0
      %v292 = vpop.trf.xlu0
      %v293 = vpop.trf.xlu0
      %v294 = vpop.trf.xlu0
      %v295 = vpop.trf.xlu0
      %v296 = vpop.trf.xlu0
      %vm297 = vcmask 523264
      %298 = vst.msk [vmem:[%s188] sm:$0xff] %vm297, %v281
      %p299 = scmp.lt.s32.totalorder %s14, 1
      %s300 = scalar_select %p299, %s14, 1
      %s301 = smul.addr %s300, 8
      %s302 = scalar_lea.vmem %s3, %s301
      // Predicated region
      $region33: #{_lambda_.5} parent=31 // pred_check
        %p303 = pneg %p105
      $region34: #{_lambda_.5} parent=31 // pred_check_branch
        %305 = sbr.rel (%p303) target = $region36
      $region35: #{_lambda_.5} parent=31 // pred_region
        _
      $region36: #{_lambda_.5} parent=31 // pred_fallthru
        _
    $region32: #{_lambda_.5} parent=5 // pred_fallthru
      _
    %p306 = scmp.le.s32.totalorder 2, %s9
    // Predicated region
    $region37: #{_lambda_.5} parent=5 // pred_check
      %p307 = pneg %p306
    $region38: #{_lambda_.5} parent=5 // pred_check_branch
      %309 = sbr.rel (%p307) target = $region40
    $region39: #{_lambda_.5} parent=5 // pred_region
      %s310 = ssub.s32 %s9, 2
      // Predicated region
      $region41: #{_lambda_.5} parent=39 // pred_check
        %p311 = pneg %p111
      $region42: #{_lambda_.5} parent=39 // pred_check_branch
        %313 = sbr.rel (%p311) target = $region44
      $region43: #{_lambda_.5} parent=39 // pred_region
        %p314 = scmp.lt.s32.totalorder %s15, 1
        %s315 = scalar_select %p314, %s15, 1
        %s316 = smul.addr %s315, 8
        %s317 = scalar_lea.vmem %s3, %s316
      $region44: #{_lambda_.5} parent=39 // pred_fallthru
        _
    $region40: #{_lambda_.5} parent=5 // pred_fallthru
      _
  $region6: #{_lambda_.5} parent=0 // loop_footer
    %s13 = sadd.s32 1, %s9
  $region7: #{_lambda_.5} parent=0 // loop_footer_branch
    %8 = sbr.rel target = $region3
  $region8: #{_lambda_.5} parent=0 // loop_exit
    _

// kernel: _lambda_.4
$region0: #{_lambda_.4}
  #allocation0 [shape = 'u32[]', space=smem, size = 0x4, offset = 0x4, fixed_abs, tag = 'smem constant byte address 0x4 - core index']
  #allocation1 [shape = 'u32[72,128]{1,0:T(1,128)}', space=vmem, size = 0x9000, scoped, tag = 'internal scratch']
  %s0 = inlined_call_operand.vmem [shape: bf16[2,1,10,10,8], index: 0, kind: input, shape index: {}]
  %s1 = inlined_call_operand.vmem [shape: f32[1,10,10,1], index: 1, kind: input, shape index: {}]
  %s2 = inlined_call_operand.vmem [shape: f32[2,8], index: 2, kind: input, shape index: {}]
  %s3 = inlined_call_operand.vmem [shape: bf16[72,8], index: 3, kind: input, shape index: {}]
  %s4 = inlined_call_operand.vmem [shape: bf16[2,64,8], index: 4, kind: output, shape index: {0}]
  %s5 = inlined_call_operand.vmem [shape: f32[2,2,8], index: 5, kind: output, shape index: {1}]
  %6 = xla_tuple %s4, %s5
  %s7 = sld [smem:[#allocation0]]
  $region57: #{_lambda_.4} parent=0
    _
  %s9 = ssub.s32 1, %s7
  %s10 = scalar_select 0, %s9, %s7
  loop: start=0, step=1, limit=4
  $region2: #{_lambda_.4} parent=0 // loop_pre_header
    _
  $region3: #{_lambda_.4} parent=0 // loop_header
    %s12 = sphi 0, %s16
    %p13 = scmp.ge.s32.totalorder %s12, 4
    %s19 = sphi 0, %s31
    %s20 = sphi 0, %s27
    %s21 = sphi 0, %s19
    %s22 = sphi 0, %s20
    %s23 = sphi 0, %s21
    %s24 = sphi 0, %s22
    %s34 = sphi 0, %s36
    %s37 = sphi 0, %s34
    %s38 = sphi 0, %s37
    %s54 = sphi 0, %s38
    %s58 = sphi 0, %s58
    %s60 = sphi 0, %s58
    %s61 = sphi 0, %s60
    %s75 = sphi 0, %s61
    %s79 = sphi 0, %s79
    %s81 = sphi 0, %s79
    %s82 = sphi 0, %s81
    %s96 = sphi 0, %s82
    %s102 = sphi 0, %s104
    %s105 = sphi 0, %s102
    %s106 = sphi 0, %s105
    %s122 = sphi 0, %s106
    %s130 = sphi 0, %s132
    %s133 = sphi 0, %s130
    %s134 = sphi 0, %s133
    %s150 = sphi 0, %s134
    %s158 = sphi 0, %s160
    %s161 = sphi 0, %s158
    %s162 = sphi 0, %s161
    %s178 = sphi 0, %s162
  $region4: #{_lambda_.4} parent=0 // loop_header_branch
    %15 = sbr.rel (%p13) target = $region8
  $region5: #{_lambda_.4} parent=0 // loop_body
    %s17 = ssub.s32 %s12, 1
    %s18 = ssub.s32 %s12, 2
    %s25 = sadd.s32 1, %s20
    %p26 = scmp.ge.s32.totalorder %s25, 1
    %s27 = scalar_select %p26, 0, %s25
    %s28 = sadd.s32 1, %s19
    %s29 = scalar_select %p26, %s28, %s19
    %p30 = scmp.ge.s32.totalorder %s29, 2
    %s31 = scalar_select %p30, 0, %s29
    %s32 = ssub.s32 %s19, %s31
    %p33 = scmp.eq.s32.totalorder %s32, 0
    %s35 = sadd.s32 %s34, 1
    %s36 = scalar_select %p33, %s34, %s35
    %p39 = pneg %p33
    %p40 = scmp.eq.s32.totalorder %s12, 1
    %p41 = por %p39, %p40
    %p42 = scmp.ne.s32.totalorder %s34, %s37
    %p43 = scmp.eq.s32.totalorder %s12, 0
    %p44 = por %p42, %p43
    %p45 = scmp.ne.s32.totalorder %s34, %s37
    %p46 = scmp.eq.s32.totalorder %s17, 1
    %p47 = por %p45, %p46
    %p48 = scmp.ne.s32.totalorder %s37, %s38
    %p49 = scmp.eq.s32.totalorder %s17, 0
    %p50 = por %p48, %p49
    %p51 = scmp.ne.s32.totalorder %s37, %s38
    %p52 = scmp.eq.s32.totalorder %s18, 1
    %p53 = por %p51, %p52
    %p55 = scmp.ne.s32.totalorder %s38, %s54
    %p56 = scmp.eq.s32.totalorder %s18, 0
    %p57 = por %p55, %p56
    %s59 = sadd.s32 %s58, 1
    %p62 = scmp.eq.s32.totalorder %s12, 1
    %p63 = scmp.ne.s32.totalorder %s58, %s60
    %p64 = scmp.eq.s32.totalorder %s12, 0
    %p65 = por %p63, %p64
    %p66 = scmp.ne.s32.totalorder %s58, %s60
    %p67 = scmp.eq.s32.totalorder %s17, 1
    %p68 = por %p66, %p67
    %p69 = scmp.ne.s32.totalorder %s60, %s61
    %p70 = scmp.eq.s32.totalorder %s17, 0
    %p71 = por %p69, %p70
    %p72 = scmp.ne.s32.totalorder %s60, %s61
    %p73 = scmp.eq.s32.totalorder %s18, 1
    %p74 = por %p72, %p73
    %p76 = scmp.ne.s32.totalorder %s61, %s75
    %p77 = scmp.eq.s32.totalorder %s18, 0
    %p78 = por %p76, %p77
    %s80 = sadd.s32 %s79, 1
    %p83 = scmp.eq.s32.totalorder %s12, 1
    %p84 = scmp.ne.s32.totalorder %s79, %s81
    %p85 = scmp.eq.s32.totalorder %s12, 0
    %p86 = por %p84, %p85
    %p87 = scmp.ne.s32.totalorder %s79, %s81
    %p88 = scmp.eq.s32.totalorder %s17, 1
    %p89 = por %p87, %p88
    %p90 = scmp.ne.s32.totalorder %s81, %s82
    %p91 = scmp.eq.s32.totalorder %s17, 0
    %p92 = por %p90, %p91
    %p93 = scmp.ne.s32.totalorder %s81, %s82
    %p94 = scmp.eq.s32.totalorder %s18, 1
    %p95 = por %p93, %p94
    %p97 = scmp.ne.s32.totalorder %s82, %s96
    %p98 = scmp.eq.s32.totalorder %s18, 0
    %p99 = por %p97, %p98
    %s100 = ssub.s32 %s20, %s27
    %p101 = scmp.eq.s32.totalorder %s100, 0
    %s103 = sadd.s32 %s102, 1
    %s104 = scalar_select %p101, %s102, %s103
    %p107 = pneg %p101
    %p108 = scmp.eq.s32.totalorder %s12, 1
    %p109 = por %p107, %p108
    %p110 = scmp.ne.s32.totalorder %s102, %s105
    %p111 = scmp.eq.s32.totalorder %s12, 0
    %p112 = por %p110, %p111
    %p113 = scmp.ne.s32.totalorder %s102, %s105
    %p114 = scmp.eq.s32.totalorder %s17, 1
    %p115 = por %p113, %p114
    %p116 = scmp.ne.s32.totalorder %s105, %s106
    %p117 = scmp.eq.s32.totalorder %s17, 0
    %p118 = por %p116, %p117
    %p119 = scmp.ne.s32.totalorder %s105, %s106
    %p120 = scmp.eq.s32.totalorder %s18, 1
    %p121 = por %p119, %p120
    %p123 = scmp.ne.s32.totalorder %s106, %s122
    %p124 = scmp.eq.s32.totalorder %s18, 0
    %p125 = por %p123, %p124
    %s126 = ssub.s32 %s19, %s31
    %s127 = ssub.s32 %s20, %s27
    %s128 = sor.u32 %s126, %s127
    %p129 = scmp.eq.s32.totalorder %s128, 0
    %s131 = sadd.s32 %s130, 1
    %s132 = scalar_select %p129, %s130, %s131
    %p135 = pneg %p129
    %p136 = scmp.eq.s32.totalorder %s12, 1
    %p137 = por %p135, %p136
    %p138 = scmp.ne.s32.totalorder %s130, %s133
    %p139 = scmp.eq.s32.totalorder %s12, 0
    %p140 = por %p138, %p139
    %p141 = scmp.ne.s32.totalorder %s130, %s133
    %p142 = scmp.eq.s32.totalorder %s17, 1
    %p143 = por %p141, %p142
    %p144 = scmp.ne.s32.totalorder %s133, %s134
    %p145 = scmp.eq.s32.totalorder %s17, 0
    %p146 = por %p144, %p145
    %p147 = scmp.ne.s32.totalorder %s133, %s134
    %p148 = scmp.eq.s32.totalorder %s18, 1
    %p149 = por %p147, %p148
    %p151 = scmp.ne.s32.totalorder %s134, %s150
    %p152 = scmp.eq.s32.totalorder %s18, 0
    %p153 = por %p151, %p152
    %s154 = ssub.s32 %s19, %s31
    %s155 = ssub.s32 %s20, %s27
    %s156 = sor.u32 %s154, %s155
    %p157 = scmp.eq.s32.totalorder %s156, 0
    %s159 = sadd.s32 %s158, 1
    %s160 = scalar_select %p157, %s158, %s159
    %p163 = pneg %p157
    %p164 = scmp.eq.s32.totalorder %s12, 1
    %p165 = por %p163, %p164
    %p166 = scmp.ne.s32.totalorder %s158, %s161
    %p167 = scmp.eq.s32.totalorder %s12, 0
    %p168 = por %p166, %p167
    %p169 = scmp.ne.s32.totalorder %s158, %s161
    %p170 = scmp.eq.s32.totalorder %s17, 1
    %p171 = por %p169, %p170
    %p172 = scmp.ne.s32.totalorder %s161, %s162
    %p173 = scmp.eq.s32.totalorder %s17, 0
    %p174 = por %p172, %p173
    %p175 = scmp.ne.s32.totalorder %s161, %s162
    %p176 = scmp.eq.s32.totalorder %s18, 1
    %p177 = por %p175, %p176
    %p179 = scmp.ne.s32.totalorder %s162, %s178
    %p180 = scmp.eq.s32.totalorder %s18, 0
    %p181 = por %p179, %p180
    %p182 = scmp.le.s32.totalorder 1, %s12
    %p183 = scmp.lt.s32.totalorder %s12, 3
    %p184 = pnand %p182, %p183
    %p185 = pneg %p184
    // Predicated region
    $region9: #{_lambda_.4} parent=5 // pred_check
      _
    $region10: #{_lambda_.4} parent=5 // pred_check_branch
      %187 = sbr.rel (%p184) target = $region12
    $region11: #{_lambda_.4} parent=5 // pred_region
      %s188 = ssub.s32 %s12, 1
      // Predicated region
      $region13: #{_lambda_.4} parent=11 // pred_check
        %p189 = pneg %p71
      $region14: #{_lambda_.4} parent=11 // pred_check_branch
        %191 = sbr.rel (%p189) target = $region16
      $region15: #{_lambda_.4} parent=11 // pred_region
        _
      $region16: #{_lambda_.4} parent=11 // pred_fallthru
        _
      // Predicated region
      $region17: #{_lambda_.4} parent=11 // pred_check
        %p192 = pneg %p92
      $region18: #{_lambda_.4} parent=11 // pred_check_branch
        %194 = sbr.rel (%p192) target = $region20
      $region19: #{_lambda_.4} parent=11 // pred_region
        _
      $region20: #{_lambda_.4} parent=11 // pred_fallthru
        _
      // Predicated region
      $region21: #{_lambda_.4} parent=11 // pred_check
        %p195 = pneg %p118
      $region22: #{_lambda_.4} parent=11 // pred_check_branch
        %197 = sbr.rel (%p195) target = $region24
      $region23: #{_lambda_.4} parent=11 // pred_region
        %p198 = scmp.lt.s32.totalorder %s22, 0
        %s199 = scalar_select %p198, %s22, 0
        %s200 = smul.addr %s199, 4
        %s201 = scalar_lea.vmem %s3, %s200
      $region24: #{_lambda_.4} parent=11 // pred_fallthru
        _
    $region12: #{_lambda_.4} parent=5 // pred_fallthru
      _
    %p202 = scmp.lt.s32.totalorder %s12, 2
    // Predicated region
    $region25: #{_lambda_.4} parent=5 // pred_check
      %p203 = pneg %p202
    $region26: #{_lambda_.4} parent=5 // pred_check_branch
      %205 = sbr.rel (%p203) target = $region28
    $region27: #{_lambda_.4} parent=5 // pred_region
      // Predicated region
      $region29: #{_lambda_.4} parent=27 // pred_check
        %p206 = pneg %p44
      $region30: #{_lambda_.4} parent=27 // pred_check_branch
        %208 = sbr.rel (%p206) target = $region32
      $region31: #{_lambda_.4} parent=27 // pred_region
        %p209 = scmp.lt.s32.totalorder %s19, 1
        %s210 = scalar_select %p209, %s19, 1
        %s211 = smul.addr %s210, 20
        %s212 = smul.addr %s211, 4
        %s213 = scalar_lea.vmem %s0, %s212
      $region32: #{_lambda_.4} parent=27 // pred_fallthru
        _
    $region28: #{_lambda_.4} parent=5 // pred_fallthru
      _
    %p214 = scmp.le.s32.totalorder 1, %s12
    %p215 = scmp.lt.s32.totalorder %s12, 3
    %p216 = pnand %p214, %p215
    %p217 = pneg %p216
    // Predicated region
    $region33: #{_lambda_.4} parent=5 // pred_check
      _
    $region34: #{_lambda_.4} parent=5 // pred_check_branch
      %219 = sbr.rel (%p216) target = $region36
    $region35: #{_lambda_.4} parent=5 // pred_region
      %s220 = ssub.s32 %s12, 1
      %p221 = scmp.lt.s32.totalorder %s21, 1
      %s222 = scalar_select %p221, %s21, 1
      %s223 = smul.addr %s222, 20
      %s224 = smul.addr %s223, 4
      %s225 = scalar_lea.vmem %s0, %s224
      %p226 = pneg %p50
      %p227 = pneg %p47
      %p228 = pneg %p71
      %p229 = pneg %p68
      %p230 = pneg %p92
      %p231 = pneg %p89
      %p232 = scmp.lt.s32.totalorder %s22, 0
      %s233 = scalar_select %p232, %s22, 0
      %s234 = smul.addr %s233, 4
      %s235 = scalar_lea.vmem %s3, %s234
      %p236 = pneg %p118
      %p237 = pneg %p115
      %p238 = pneg %p146
      %p239 = pneg %p143
      %p240 = scmp.lt.s32.totalorder %s21, 1
      %s241 = scalar_select %p240, %s21, 1
      %p242 = scmp.lt.s32.totalorder %s22, 0
      %s243 = scalar_select %p242, %s22, 0
      %s244 = smul.addr %s241, 8
      %s245 = sadd.s32 %s243, %s244
      %s246 = smul.addr %s245, 4
      %s247 = scalar_lea.vmem %s4, %s246
      %p248 = pneg %p174
      %p249 = pneg %p171
      %p250 = scmp.lt.s32.totalorder %s21, 1
      %s251 = scalar_select %p250, %s21, 1
      %p252 = scmp.lt.s32.totalorder %s22, 0
      %s253 = scalar_select %p252, %s22, 0
      %s254 = sadd.s32 %s253, %s251
      %s255 = smul.addr %s254, 2
      %s256 = scalar_lea.vmem %s5, %s255
      %p257 = scmp.lt.s32.totalorder %s21, 1
      %s258 = scalar_select %p257, %s21, 1
      %s259 = smul.addr %s258, 20
      %s260 = smul.addr %s259, 4
      %s261 = scalar_lea.vmem %s0, %s260
      %p262 = scmp.lt.s32.totalorder %s22, 0
      %s263 = scalar_select %p262, %s22, 0
      %s264 = smul.addr %s263, 4
      %s265 = scalar_lea.vmem %s3, %s264
      %p266 = scmp.lt.s32.totalorder %s21, 1
      %s267 = scalar_select %p266, %s21, 1
      %p268 = scmp.lt.s32.totalorder %s22, 0
      %s269 = scalar_select %p268, %s22, 0
      %s270 = smul.addr %s267, 8
      %s271 = sadd.s32 %s269, %s270
      %s272 = smul.addr %s271, 4
      %s273 = scalar_lea.vmem %s4, %s272
      %p274 = scmp.lt.s32.totalorder %s21, 1
      %s275 = scalar_select %p274, %s21, 1
      %p276 = scmp.lt.s32.totalorder %s22, 0
      %s277 = scalar_select %p276, %s22, 0
      %s278 = sadd.s32 %s277, %s275
      %s279 = smul.addr %s278, 2
      %s280 = scalar_lea.vmem %s5, %s279
      %v282 = vld [vmem:[%s2] sm:$0x3]
      %v283 = vld [vmem:[%s261] sm:$0xf]
      %v284 = vld [vmem:[%s261 + $0x4] sm:$0x1]
      %v285 = vld [vmem:[%s261 + $0x8] sm:$0xf]
      %v286 = vld [vmem:[%s261 + $0xc] sm:$0x1]
      %v287 = vld [vmem:[%s261 + $0x10] sm:$0xf]
      %v288 = vld [vmem:[%s261 + $0x14] sm:$0x1]
      %v289 = vld [vmem:[%s261 + $0x18] sm:$0xf]
      %v290 = vld [vmem:[%s261 + $0x1c] sm:$0x1]
      %v291 = vld [vmem:[%s261 + $0x20] sm:$0xf]
      %v292 = vld [vmem:[%s261 + $0x24] sm:$0x1]
      %v293 = vld [vmem:[%s261 + $0x28] sm:$0xf]
      %v294 = vld [vmem:[%s261 + $0x2c] sm:$0x1]
      %v295 = vld [vmem:[%s261 + $0x30] sm:$0xf]
      %v296 = vld [vmem:[%s261 + $0x34] sm:$0x1]
      %v297 = vld [vmem:[%s261 + $0x38] sm:$0xf]
      %v298 = vld [vmem:[%s261 + $0x3c] sm:$0x1]
      %v299 = vld [vmem:[%s261 + $0x40] sm:$0xf]
      %v300 = vld [vmem:[%s261 + $0x44] sm:$0x1]
      %v301 = vld [vmem:[%s261 + $0x48] sm:$0xf]
      %v302 = vld [vmem:[%s261 + $0x4c] sm:$0x1]
      %v303 = vunpack.c.l.bf16 %v283
      %v304 = vunpack.c.l.bf16 %v284
      %v305 = vunpack.c.l.bf16 %v285
      %v306 = vunpack.c.l.bf16 %v286
      %v307 = vunpack.c.l.bf16 %v287
      %v308 = vunpack.c.l.bf16 %v288
      %v309 = vunpack.c.l.bf16 %v289
      %v310 = vunpack.c.l.bf16 %v290
      %v311 = vunpack.c.l.bf16 %v291
      %v312 = vunpack.c.l.bf16 %v292
      %v313 = vunpack.c.l.bf16 %v293
      %v314 = vunpack.c.l.bf16 %v294
      %v315 = vunpack.c.l.bf16 %v295
      %v316 = vunpack.c.l.bf16 %v296
      %v317 = vunpack.c.l.bf16 %v297
      %v318 = vunpack.c.l.bf16 %v298
      %v319 = vunpack.c.l.bf16 %v299
      %v320 = vunpack.c.l.bf16 %v300
      %v321 = vunpack.c.l.bf16 %v301
      %v322 = vunpack.c.l.bf16 %v302
      %v323 = vperm.slane %v282, 0
      %v324 = vmul.f32 %v303, %v323
      %v325 = vmul.f32 %v304, %v323
      %v326 = vmul.f32 %v305, %v323
      %v327 = vmul.f32 %v306, %v323
      %v328 = vmul.f32 %v307, %v323
      %v329 = vmul.f32 %v308, %v323
      %v330 = vmul.f32 %v309, %v323
      %v331 = vmul.f32 %v310, %v323
      %v332 = vmul.f32 %v311, %v323
      %v333 = vmul.f32 %v312, %v323
      %v334 = vmul.f32 %v313, %v323
      %v335 = vmul.f32 %v314, %v323
      %v336 = vmul.f32 %v315, %v323
      %v337 = vmul.f32 %v316, %v323
      %v338 = vmul.f32 %v317, %v323
      %v339 = vmul.f32 %v318, %v323
      %v340 = vmul.f32 %v319, %v323
      %v341 = vmul.f32 %v320, %v323
      %v342 = vmul.f32 %v321, %v323
      %v343 = vmul.f32 %v322, %v323
      %v344 = vperm.slane %v282, 1
      %v345 = vadd.f32 %v324, %v344
      %v346 = vadd.f32 %v325, %v344
      %v347 = vadd.f32 %v326, %v344
      %v348 = vadd.f32 %v327, %v344
      %v349 = vadd.f32 %v328, %v344
      %v350 = vadd.f32 %v329, %v344
      %v351 = vadd.f32 %v330, %v344
      %v352 = vadd.f32 %v331, %v344
      %v353 = vadd.f32 %v332, %v344
      %v354 = vadd.f32 %v333, %v344
      %v355 = vadd.f32 %v334, %v344
      %v356 = vadd.f32 %v335, %v344
      %v357 = vadd.f32 %v336, %v344
      %v358 = vadd.f32 %v337, %v344
      %v359 = vadd.f32 %v338, %v344
      %v360 = vadd.f32 %v339, %v344
      %v361 = vadd.f32 %v340, %v344
      %v362 = vadd.f32 %v341, %v344
      %v363 = vadd.f32 %v342, %v344
      %v364 = vadd.f32 %v343, %v344
      %v365 = vmax.f32 %v345, 0.0
      %v366 = vmax.f32 %v346, 0.0
      %v367 = vmax.f32 %v347, 0.0
      %v368 = vmax.f32 %v348, 0.0
      %v369 = vmax.f32 %v349, 0.0
      %v370 = vmax.f32 %v350, 0.0
      %v371 = vmax.f32 %v351, 0.0
      %v372 = vmax.f32 %v352, 0.0
      %v373 = vmax.f32 %v353, 0.0
      %v374 = vmax.f32 %v354, 0.0
      %v375 = vmax.f32 %v355, 0.0
      %v376 = vmax.f32 %v356, 0.0
      %v377 = vmax.f32 %v357, 0.0
      %v378 = vmax.f32 %v358, 0.0
      %v379 = vmax.f32 %v359, 0.0
      %v380 = vmax.f32 %v360, 0.0
      %v381 = vmax.f32 %v361, 0.0
      %v382 = vmax.f32 %v362, 0.0
      %v383 = vmax.f32 %v363, 0.0
      %v384 = vmax.f32 %v364, 0.0
      %v385 = vld [vmem:[%s1] sm:$0xff]
      %v386 = vld [vmem:[%s1 + $0x8] sm:$0x3]
      %v387 = vld [vmem:[%s1 + $0x10] sm:$0xff]
      %v388 = vld [vmem:[%s1 + $0x18] sm:$0x3]
      %v389 = vld [vmem:[%s1 + $0x20] sm:$0xff]
      %v390 = vld [vmem:[%s1 + $0x28] sm:$0x3]
      %v391 = vld [vmem:[%s1 + $0x30] sm:$0xff]
      %v392 = vld [vmem:[%s1 + $0x38] sm:$0x3]
      %v393 = vld [vmem:[%s1 + $0x40] sm:$0xff]
      %v394 = vld [vmem:[%s1 + $0x48] sm:$0x3]
      %v395 = vld [vmem:[%s1 + $0x50] sm:$0xff]
      %v396 = vld [vmem:[%s1 + $0x58] sm:$0x3]
      %v397 = vld [vmem:[%s1 + $0x60] sm:$0xff]
      %v398 = vld [vmem:[%s1 + $0x68] sm:$0x3]
      %v399 = vld [vmem:[%s1 + $0x70] sm:$0xff]
      %v400 = vld [vmem:[%s1 + $0x78] sm:$0x3]
      %v401 = vld [vmem:[%s1 + $0x80] sm:$0xff]
      %v402 = vld [vmem:[%s1 + $0x88] sm:$0x3]
      %v403 = vld [vmem:[%s1 + $0x90] sm:$0xff]
      %v404 = vld [vmem:[%s1 + $0x98] sm:$0x3]
      %406 = vset.pattern.permute.xlu0 0
      %407 = vperm.xlu0 %406, %v385
      %v408 = vpop.permute.xlu0 %407
      %411 = vset.pattern.permute.xlu0 0
      %412 = vperm.xlu0 %411, %v386
      %v413 = vpop.permute.xlu0 %412
      %416 = vset.pattern.permute.xlu0 0
      %417 = vperm.xlu0 %416, %v387
      %v418 = vpop.permute.xlu0 %417
      %421 = vset.pattern.permute.xlu0 0
      %422 = vperm.xlu0 %421, %v388
      %v423 = vpop.permute.xlu0 %422
      %426 = vset.pattern.permute.xlu0 0
      %427 = vperm.xlu0 %426, %v389
      %v428 = vpop.permute.xlu0 %427
      %431 = vset.pattern.permute.xlu0 0
      %432 = vperm.xlu0 %431, %v390
      %v433 = vpop.permute.xlu0 %432
      %436 = vset.pattern.permute.xlu0 0
      %437 = vperm.xlu0 %436, %v391
      %v438 = vpop.permute.xlu0 %437
      %441 = vset.pattern.permute.xlu0 0
      %442 = vperm.xlu0 %441, %v392
      %v443 = vpop.permute.xlu0 %442
      %446 = vset.pattern.permute.xlu0 0
      %447 = vperm.xlu0 %446, %v393
      %v448 = vpop.permute.xlu0 %447
      %451 = vset.pattern.permute.xlu0 0
      %452 = vperm.xlu0 %451, %v394
      %v453 = vpop.permute.xlu0 %452
      %456 = vset.pattern.permute.xlu0 0
      %457 = vperm.xlu0 %456, %v395
      %v458 = vpop.permute.xlu0 %457
      %461 = vset.pattern.permute.xlu0 0
      %462 = vperm.xlu0 %461, %v396
      %v463 = vpop.permute.xlu0 %462
      %466 = vset.pattern.permute.xlu0 0
      %467 = vperm.xlu0 %466, %v397
      %v468 = vpop.permute.xlu0 %467
      %471 = vset.pattern.permute.xlu0 0
      %472 = vperm.xlu0 %471, %v398
      %v473 = vpop.permute.xlu0 %472
      %476 = vset.pattern.permute.xlu0 0
      %477 = vperm.xlu0 %476, %v399
      %v478 = vpop.permute.xlu0 %477
      %481 = vset.pattern.permute.xlu0 0
      %482 = vperm.xlu0 %481, %v400
      %v483 = vpop.permute.xlu0 %482
      %486 = vset.pattern.permute.xlu0 0
      %487 = vperm.xlu0 %486, %v401
      %v488 = vpop.permute.xlu0 %487
      %491 = vset.pattern.permute.xlu0 0
      %492 = vperm.xlu0 %491, %v402
      %v493 = vpop.permute.xlu0 %492
      %496 = vset.pattern.permute.xlu0 0
      %497 = vperm.xlu0 %496, %v403
      %v498 = vpop.permute.xlu0 %497
      %501 = vset.pattern.permute.xlu0 0
      %502 = vperm.xlu0 %501, %v404
      %v503 = vpop.permute.xlu0 %502
      %v505 = vmul.f32 %v365, %v408
      %v506 = vmul.f32 %v366, %v413
      %v507 = vmul.f32 %v367, %v418
      %v508 = vmul.f32 %v368, %v423
      %v509 = vmul.f32 %v369, %v428
      %v510 = vmul.f32 %v370, %v433
      %v511 = vmul.f32 %v371, %v438
      %v512 = vmul.f32 %v372, %v443
      %v513 = vmul.f32 %v373, %v448
      %v514 = vmul.f32 %v374, %v453
      %v515 = vmul.f32 %v375, %v458
      %v516 = vmul.f32 %v376, %v463
      %v517 = vmul.f32 %v377, %v468
      %v518 = vmul.f32 %v378, %v473
      %v519 = vmul.f32 %v379, %v478
      %v520 = vmul.f32 %v380, %v483
      %v521 = vmul.f32 %v381, %v488
      %v522 = vmul.f32 %v382, %v493
      %v523 = vmul.f32 %v383, %v498
      %v524 = vmul.f32 %v384, %v503
      %v525 = vpack.c.bf16 %v505, %v505
      %v526 = vpack.c.bf16 %v506, %v506
      %v527 = vpack.c.bf16 %v507, %v507
      %v528 = vpack.c.bf16 %v508, %v508
      %v529 = vpack.c.bf16 %v509, %v509
      %v530 = vpack.c.bf16 %v510, %v510
      %v531 = vpack.c.bf16 %v511, %v511
      %v532 = vpack.c.bf16 %v512, %v512
      %v533 = vpack.c.bf16 %v513, %v513
      %v534 = vpack.c.bf16 %v514, %v514
      %v535 = vpack.c.bf16 %v515, %v515
      %v536 = vpack.c.bf16 %v516, %v516
      %v537 = vpack.c.bf16 %v517, %v517
      %v538 = vpack.c.bf16 %v518, %v518
      %v539 = vpack.c.bf16 %v519, %v519
      %v540 = vpack.c.bf16 %v520, %v520
      %v541 = vpack.c.bf16 %v521, %v521
      %v542 = vpack.c.bf16 %v522, %v522
      %v543 = vpack.c.bf16 %v523, %v523
      %v544 = vpack.c.bf16 %v524, %v524
      %v561 = vunpack.c.l.b16 %v525
      %v562 = vunpack.c.l.b16 %v526
      %v563 = vunpack.c.l.b16 %v527
      %v564 = vunpack.c.l.b16 %v528
      %v565 = vunpack.c.l.b16 %v529
      %v566 = vunpack.c.l.b16 %v530
      %v567 = vunpack.c.l.b16 %v531
      %v568 = vunpack.c.l.b16 %v532
      %v569 = vunpack.c.l.b16 %v533
      %v570 = vunpack.c.l.b16 %v534
      %v571 = vunpack.c.l.b16 %v535
      %v572 = vunpack.c.l.b16 %v536
      %v573 = vunpack.c.l.b16 %v537
      %v574 = vunpack.c.l.b16 %v538
      %v575 = vunpack.c.l.b16 %v539
      %v576 = vunpack.c.l.b16 %v540
      %v577 = vpack.c.b16 %v562, %v561
      %v578 = vpack.c.b16 %v564, %v563
      %v579 = vpack.c.b16 %v566, %v565
      %v580 = vpack.c.b16 %v568, %v567
      %v581 = vpack.c.b16 %v570, %v569
      %v582 = vpack.c.b16 %v572, %v571
      %v583 = vpack.c.b16 %v574, %v573
      %v584 = vpack.c.b16 %v576, %v575
      %v586 = vshrl.u32 %v577, 16
      %v588 = vshll.u32 %v577, 16
      %v590 = vrot.slane %v588, 1
      %v591 = vor.u32 %v586, %v590
      %v593 = vshrl.u32 %v578, 16
      %v595 = vshll.u32 %v578, 16
      %v597 = vrot.slane %v595, 1
      %v598 = vor.u32 %v593, %v597
      %v600 = vshrl.u32 %v579, 16
      %v602 = vshll.u32 %v579, 16
      %v604 = vrot.slane %v602, 1
      %v605 = vor.u32 %v600, %v604
      %v607 = vshrl.u32 %v580, 16
      %v609 = vshll.u32 %v580, 16
      %v611 = vrot.slane %v609, 1
      %v612 = vor.u32 %v607, %v611
      %v614 = vshrl.u32 %v581, 16
      %v616 = vshll.u32 %v581, 16
      %v618 = vrot.slane %v616, 1
      %v619 = vor.u32 %v614, %v618
      %v621 = vshrl.u32 %v582, 16
      %v623 = vshll.u32 %v582, 16
      %v625 = vrot.slane %v623, 1
      %v626 = vor.u32 %v621, %v625
      %v628 = vshrl.u32 %v583, 16
      %v630 = vshll.u32 %v583, 16
      %v632 = vrot.slane %v630, 1
      %v633 = vor.u32 %v628, %v632
      %v635 = vshrl.u32 %v584, 16
      %v637 = vshll.u32 %v584, 16
      %v639 = vrot.slane %v637, 1
      %v640 = vor.u32 %v635, %v639
      %641 = vrot.lane.b32.xlu0 %v591, 8
      %v642 = vpop.permute.xlu0 %641
      %643 = vrot.lane.b32.xlu0 %v598, 8
      %v644 = vpop.permute.xlu0 %643
      %645 = vrot.lane.b32.xlu0 %v605, 8
      %v646 = vpop.permute.xlu0 %645
      %647 = vrot.lane.b32.xlu0 %v612, 8
      %v648 = vpop.permute.xlu0 %647
      %649 = vrot.lane.b32.xlu0 %v619, 8
      %v650 = vpop.permute.xlu0 %649
      %651 = vrot.lane.b32.xlu0 %v626, 8
      %v652 = vpop.permute.xlu0 %651
      %653 = vrot.lane.b32.xlu0 %v633, 8
      %v654 = vpop.permute.xlu0 %653
      %655 = vrot.lane.b32.xlu0 %v640, 8
      %v656 = vpop.permute.xlu0 %655
      %v657 = vrot.slane %v577, 1
      %v658 = vrot.slane %v578, 1
      %v659 = vrot.slane %v579, 1
      %v660 = vrot.slane %v580, 1
      %v661 = vrot.slane %v581, 1
      %v662 = vrot.slane %v582, 1
      %v663 = vrot.slane %v583, 1
      %v664 = vrot.slane %v584, 1
      %665 = vrot.lane.b32.xlu0 %v657, 16
      %v666 = vpop.permute.xlu0 %665
      %667 = vrot.lane.b32.xlu0 %v658, 16
      %v668 = vpop.permute.xlu0 %667
      %669 = vrot.lane.b32.xlu0 %v659, 16
      %v670 = vpop.permute.xlu0 %669
      %671 = vrot.lane.b32.xlu0 %v660, 16
      %v672 = vpop.permute.xlu0 %671
      %673 = vrot.lane.b32.xlu0 %v661, 16
      %v674 = vpop.permute.xlu0 %673
      %675 = vrot.lane.b32.xlu0 %v662, 16
      %v676 = vpop.permute.xlu0 %675
      %677 = vrot.lane.b32.xlu0 %v663, 16
      %v678 = vpop.permute.xlu0 %677
      %679 = vrot.lane.b32.xlu0 %v664, 16
      %v680 = vpop.permute.xlu0 %679
      %v682 = vunpack.c.l.b16 %v541
      %v683 = vpack.c.b16 %v563, %v563
      %v684 = vpack.c.b16 %v565, %v565
      %v685 = vpack.c.b16 %v567, %v567
      %v686 = vpack.c.b16 %v569, %v569
      %v687 = vpack.c.b16 %v571, %v571
      %v688 = vpack.c.b16 %v573, %v573
      %v689 = vpack.c.b16 %v575, %v575
      %v690 = vpack.c.b16 %v682, %v682
      %691 = vrot.lane.b32.xlu0 %v683, 24
      %v692 = vpop.permute.xlu0 %691
      %693 = vrot.lane.b32.xlu0 %v684, 24
      %v694 = vpop.permute.xlu0 %693
      %695 = vrot.lane.b32.xlu0 %v685, 24
      %v696 = vpop.permute.xlu0 %695
      %697 = vrot.lane.b32.xlu0 %v686, 24
      %v698 = vpop.permute.xlu0 %697
      %699 = vrot.lane.b32.xlu0 %v687, 24
      %v700 = vpop.permute.xlu0 %699
      %701 = vrot.lane.b32.xlu0 %v688, 24
      %v702 = vpop.permute.xlu0 %701
      %703 = vrot.lane.b32.xlu0 %v689, 24
      %v704 = vpop.permute.xlu0 %703
      %705 = vrot.lane.b32.xlu0 %v690, 24
      %v706 = vpop.permute.xlu0 %705
      %v708 = vunpack.c.l.b16 %v542
      %v709 = vpack.c.b16 %v708, %v682
      %v711 = vshrl.u32 %v709, 16
      %v713 = vshll.u32 %v709, 16
      %v715 = vrot.slane %v713, 1
      %v716 = vor.u32 %v711, %v715
      %717 = vrot.lane.b32.xlu0 %v598, 32
      %v718 = vpop.permute.xlu0 %717
      %719 = vrot.lane.b32.xlu0 %v605, 32
      %v720 = vpop.permute.xlu0 %719
      %721 = vrot.lane.b32.xlu0 %v612, 32
      %v722 = vpop.permute.xlu0 %721
      %723 = vrot.lane.b32.xlu0 %v619, 32
      %v724 = vpop.permute.xlu0 %723
      %725 = vrot.lane.b32.xlu0 %v626, 32
      %v726 = vpop.permute.xlu0 %725
      %727 = vrot.lane.b32.xlu0 %v633, 32
      %v728 = vpop.permute.xlu0 %727
      %729 = vrot.lane.b32.xlu0 %v640, 32
      %v730 = vpop.permute.xlu0 %729
      %731 = vrot.lane.b32.xlu0 %v716, 32
      %v732 = vpop.permute.xlu0 %731
      %v733 = vrot.slane %v709, 1
      %734 = vrot.lane.b32.xlu0 %v658, 40
      %v735 = vpop.permute.xlu0 %734
      %736 = vrot.lane.b32.xlu0 %v659, 40
      %v737 = vpop.permute.xlu0 %736
      %738 = vrot.lane.b32.xlu0 %v660, 40
      %v739 = vpop.permute.xlu0 %738
      %740 = vrot.lane.b32.xlu0 %v661, 40
      %v741 = vpop.permute.xlu0 %740
      %742 = vrot.lane.b32.xlu0 %v662, 40
      %v743 = vpop.permute.xlu0 %742
      %744 = vrot.lane.b32.xlu0 %v663, 40
      %v745 = vpop.permute.xlu0 %744
      %746 = vrot.lane.b32.xlu0 %v664, 40
      %v747 = vpop.permute.xlu0 %746
      %748 = vrot.lane.b32.xlu0 %v733, 40
      %v749 = vpop.permute.xlu0 %748
      %v751 = vunpack.c.l.b16 %v543
      %v752 = vpack.c.b16 %v751, %v751
      %753 = vrot.lane.b32.xlu0 %v684, 48
      %v754 = vpop.permute.xlu0 %753
      %755 = vrot.lane.b32.xlu0 %v685, 48
      %v756 = vpop.permute.xlu0 %755
      %757 = vrot.lane.b32.xlu0 %v686, 48
      %v758 = vpop.permute.xlu0 %757
      %759 = vrot.lane.b32.xlu0 %v687, 48
      %v760 = vpop.permute.xlu0 %759
      %761 = vrot.lane.b32.xlu0 %v688, 48
      %v762 = vpop.permute.xlu0 %761
      %763 = vrot.lane.b32.xlu0 %v689, 48
      %v764 = vpop.permute.xlu0 %763
      %765 = vrot.lane.b32.xlu0 %v690, 48
      %v766 = vpop.permute.xlu0 %765
      %767 = vrot.lane.b32.xlu0 %v752, 48
      %v768 = vpop.permute.xlu0 %767
      %v770 = vunpack.c.l.b16 %v544
      %v771 = vpack.c.b16 %v770, %v751
      %v773 = vshrl.u32 %v771, 16
      %v775 = vshll.u32 %v771, 16
      %v777 = vrot.slane %v775, 1
      %v778 = vor.u32 %v773, %v777
      %779 = vrot.lane.b32.xlu0 %v605, 56
      %v780 = vpop.permute.xlu0 %779
      %781 = vrot.lane.b32.xlu0 %v612, 56
      %v782 = vpop.permute.xlu0 %781
      %783 = vrot.lane.b32.xlu0 %v619, 56
      %v784 = vpop.permute.xlu0 %783
      %785 = vrot.lane.b32.xlu0 %v626, 56
      %v786 = vpop.permute.xlu0 %785
      %787 = vrot.lane.b32.xlu0 %v633, 56
      %v788 = vpop.permute.xlu0 %787
      %789 = vrot.lane.b32.xlu0 %v640, 56
      %v790 = vpop.permute.xlu0 %789
      %791 = vrot.lane.b32.xlu0 %v716, 56
      %v792 = vpop.permute.xlu0 %791
      %793 = vrot.lane.b32.xlu0 %v778, 56
      %v794 = vpop.permute.xlu0 %793
      %v795 = vrot.slane %v771, 1
      %796 = vrot.lane.b32.xlu0 %v659, 64
      %v797 = vpop.permute.xlu0 %796
      %798 = vrot.lane.b32.xlu0 %v660, 64
      %v799 = vpop.permute.xlu0 %798
      %800 = vrot.lane.b32.xlu0 %v661, 64
      %v801 = vpop.permute.xlu0 %800
      %802 = vrot.lane.b32.xlu0 %v662, 64
      %v803 = vpop.permute.xlu0 %802
      %804 = vrot.lane.b32.xlu0 %v663, 64
      %v805 = vpop.permute.xlu0 %804
      %806 = vrot.lane.b32.xlu0 %v664, 64
      %v807 = vpop.permute.xlu0 %806
      %808 = vrot.lane.b32.xlu0 %v733, 64
      %v809 = vpop.permute.xlu0 %808
      %810 = vrot.lane.b32.xlu0 %v795, 64
      %v811 = vpop.permute.xlu0 %810
      %vm812 = vcmask 64512
      %v815 = vsel %vm812, %v525, %v642
      %v818 = vsel %vm812, %v527, %v644
      %v821 = vsel %vm812, %v529, %v646
      %v824 = vsel %vm812, %v531, %v648
      %v827 = vsel %vm812, %v533, %v650
      %v830 = vsel %vm812, %v535, %v652
      %v833 = vsel %vm812, %v537, %v654
      %v836 = vsel %vm812, %v539, %v656
      %vm837 = vcmask 130048
      %v839 = vsel %vm837, %v815, %v666
      %v841 = vsel %vm837, %v818, %v668
      %v843 = vsel %vm837, %v821, %v670
      %v845 = vsel %vm837, %v824, %v672
      %v847 = vsel %vm837, %v827, %v674
      %v849 = vsel %vm837, %v830, %v676
      %v851 = vsel %vm837, %v833, %v678
      %v853 = vsel %vm837, %v836, %v680
      %vm854 = vcmask 195584
      %v856 = vsel %vm854, %v839, %v692
      %v858 = vsel %vm854, %v841, %v694
      %v860 = vsel %vm854, %v843, %v696
      %v862 = vsel %vm854, %v845, %v698
      %v864 = vsel %vm854, %v847, %v700
      %v866 = vsel %vm854, %v849, %v702
      %v868 = vsel %vm854, %v851, %v704
      %v870 = vsel %vm854, %v853, %v706
      %vm871 = vcmask 261120
      %v873 = vsel %vm871, %v856, %v718
      %v875 = vsel %vm871, %v858, %v720
      %v877 = vsel %vm871, %v860, %v722
      %v879 = vsel %vm871, %v862, %v724
      %v881 = vsel %vm871, %v864, %v726
      %v883 = vsel %vm871, %v866, %v728
      %v885 = vsel %vm871, %v868, %v730
      %v887 = vsel %vm871, %v870, %v732
      %vm888 = vcmask 326656
      %v890 = vsel %vm888, %v873, %v735
      %v892 = vsel %vm888, %v875, %v737
      %v894 = vsel %vm888, %v877, %v739
      %v896 = vsel %vm888, %v879, %v741
      %v898 = vsel %vm888, %v881, %v743
      %v900 = vsel %vm888, %v883, %v745
      %v902 = vsel %vm888, %v885, %v747
      %v904 = vsel %vm888, %v887, %v749
      %vm905 = vcmask 392192
      %v907 = vsel %vm905, %v890, %v754
      %v909 = vsel %vm905, %v892, %v756
      %v911 = vsel %vm905, %v894, %v758
      %v913 = vsel %vm905, %v896, %v760
      %v915 = vsel %vm905, %v898, %v762
      %v917 = vsel %vm905, %v900, %v764
      %v919 = vsel %vm905, %v902, %v766
      %v921 = vsel %vm905, %v904, %v768
      %vm922 = vcmask 457728
      %v924 = vsel %vm922, %v907, %v780
      %v926 = vsel %vm922, %v909, %v782
      %v928 = vsel %vm922, %v911, %v784
      %v930 = vsel %vm922, %v913, %v786
      %v932 = vsel %vm922, %v915, %v788
      %v934 = vsel %vm922, %v917, %v790
      %v936 = vsel %vm922, %v919, %v792
      %v938 = vsel %vm922, %v921, %v794
      %vm939 = vcmask 523264
      %v941 = vsel %vm939, %v924, %v797
      %v943 = vsel %vm939, %v926, %v799
      %v945 = vsel %vm939, %v928, %v801
      %v947 = vsel %vm939, %v930, %v803
      %v949 = vsel %vm939, %v932, %v805
      %v951 = vsel %vm939, %v934, %v807
      %v953 = vsel %vm939, %v936, %v809
      %v955 = vsel %vm939, %v938, %v811
      %v956 = vld [vmem:[%s265] sm:$0xf]
      %v957 = vld [vmem:[%s265 + $0x4] sm:$0xf]
      %v958 = vld [vmem:[%s265 + $0x8] sm:$0xf]
      %v959 = vld [vmem:[%s265 + $0xc] sm:$0xf]
      %v960 = vld [vmem:[%s265 + $0x10] sm:$0xf]
      %v961 = vld [vmem:[%s265 + $0x14] sm:$0xf]
      %v962 = vld [vmem:[%s265 + $0x18] sm:$0xf]
      %v963 = vld [vmem:[%s265 + $0x1c] sm:$0xf]
      %v964 = vld [vmem:[%s265 + $0x20] sm:$0xf]
      %v973 = vunpack.c.l.b16 %v941
      %v974 = vunpack.c.l.b16 %v943
      %v975 = vunpack.c.l.b16 %v945
      %v976 = vunpack.c.l.b16 %v947
      %v977 = vunpack.c.l.b16 %v949
      %v978 = vunpack.c.l.b16 %v951
      %v979 = vunpack.c.l.b16 %v953
      %v980 = vunpack.c.l.b16 %v955
      %v981 = vpack.c.b16 %v974, %v973
      %v982 = vpack.c.b16 %v976, %v975
      %v983 = vpack.c.b16 %v978, %v977
      %v984 = vpack.c.b16 %v980, %v979
      %v994 = vunpack.c.l.b16 %v956
      %v995 = vunpack.c.l.b16 %v957
      %v996 = vunpack.c.l.b16 %v958
      %v997 = vunpack.c.l.b16 %v959
      %v998 = vunpack.c.l.b16 %v960
      %v999 = vunpack.c.l.b16 %v961
      %v1000 = vunpack.c.l.b16 %v962
      %v1001 = vunpack.c.l.b16 %v963
      %v1002 = vunpack.c.l.b16 %v964
      %v1003 = vpack.c.b16 %v995, %v994
      %v1004 = vpack.c.b16 %v997, %v996
      %v1005 = vpack.c.b16 %v999, %v998
      %v1006 = vpack.c.b16 %v1001, %v1000
      %v1007 = vpack.c.b16 %v1002, %v1002
      %vm1012 = vcmask 588800
      %v1014 = vsel %vm1012, %v981, 0
      %v1017 = vsel %vm1012, %v982, 0
      %v1020 = vsel %vm1012, %v983, 0
      %v1023 = vsel %vm1012, %v984, 0
      %vm1025 = vcmask 1043456
      %v1027 = vsel %vm1025, %v1007, 0
      %1029 = vmatpush.bf16.msra.mxu0 0
      %1030 = vmatpush.bf16.msra.mxu0 0
      %1031 = vmatpush.bf16.msra.mxu0 0
      %1032 = vmatpush.bf16.msra.mxu0 %v1027
      %1033 = vmatpush.bf16.msra.mxu0 %v1006
      %1034 = vmatpush.bf16.msra.mxu0 %v1005
      %1035 = vmatpush.bf16.msra.mxu0 %v1004
      %1036 = vmatpush.bf16.msra.mxu0 %v1003
      %1037 = vmatmul.bf16.gmra.mxu0 %v1014
      %v1038 = vpop.f32.mrf.mxu0
      %v1039 = vadd.f32 0.0, %v1038
      %v1040 = vpop.f32.mrf.mxu0
      %v1041 = vadd.f32 0.0, %v1040
      %1042 = vmatmul.bf16.gmra.mxu0 %v1017
      %v1043 = vpop.f32.mrf.mxu0
      %v1044 = vadd.f32 0.0, %v1043
      %v1045 = vpop.f32.mrf.mxu0
      %v1046 = vadd.f32 0.0, %v1045
      %1047 = vmatmul.bf16.gmra.mxu0 %v1020
      %v1048 = vpop.f32.mrf.mxu0
      %v1049 = vadd.f32 0.0, %v1048
      %v1050 = vpop.f32.mrf.mxu0
      %v1051 = vadd.f32 0.0, %v1050
      %1052 = vmatmul.bf16.gmra.mxu0 %v1023
      %v1053 = vpop.f32.mrf.mxu0
      %v1054 = vadd.f32 0.0, %v1053
      %v1055 = vpop.f32.mrf.mxu0
      %v1056 = vadd.f32 0.0, %v1055
      %1057 = vdwg.mxu0
      %v1058 = vpack.c.bf16 %v1039, %v1039
      %v1059 = vpack.c.bf16 %v1041, %v1041
      %v1060 = vpack.c.bf16 %v1044, %v1044
      %v1061 = vpack.c.bf16 %v1046, %v1046
      %v1062 = vpack.c.bf16 %v1049, %v1049
      %v1063 = vpack.c.bf16 %v1051, %v1051
      %v1064 = vpack.c.bf16 %v1054, %v1054
      %v1065 = vpack.c.bf16 %v1056, %v1056
      %vm1066 = vcmask 60416
      %1067 = vst.msk [vmem:[%s273] sm:$0xf] %vm1066, %v1058
      %1068 = vst.msk [vmem:[%s273 + $0x4] sm:$0xf] %vm1066, %v1059
      %1069 = vst.msk [vmem:[%s273 + $0x8] sm:$0xf] %vm1066, %v1060
      %1070 = vst.msk [vmem:[%s273 + $0xc] sm:$0xf] %vm1066, %v1061
      %1071 = vst.msk [vmem:[%s273 + $0x10] sm:$0xf] %vm1066, %v1062
      %1072 = vst.msk [vmem:[%s273 + $0x14] sm:$0xf] %vm1066, %v1063
      %1073 = vst.msk [vmem:[%s273 + $0x18] sm:$0xf] %vm1066, %v1064
      %1074 = vst.msk [vmem:[%s273 + $0x1c] sm:$0xf] %vm1066, %v1065
      %v1075 = vsel %vm812, %v1039, 0.0
      %v1076 = vsel %vm812, %v1041, 0.0
      %v1077 = vadd.f32 %v1075, %v1076
      %v1078 = vsel %vm812, %v1044, 0.0
      %v1079 = vadd.f32 %v1077, %v1078
      %v1080 = vsel %vm812, %v1046, 0.0
      %v1081 = vadd.f32 %v1079, %v1080
      %v1082 = vsel %vm812, %v1049, 0.0
      %v1083 = vadd.f32 %v1081, %v1082
      %v1084 = vsel %vm812, %v1051, 0.0
      %v1085 = vadd.f32 %v1083, %v1084
      %v1086 = vsel %vm812, %v1054, 0.0
      %v1087 = vadd.f32 %v1085, %v1086
      %v1088 = vsel %vm812, %v1056, 0.0
      %v1089 = vadd.f32 %v1087, %v1088
      %v1090 = vrot.slane %v1089, 4
      %v1091 = vadd.f32 %v1089, %v1090
      %v1092 = vrot.slane %v1091, 2
      %v1093 = vadd.f32 %v1091, %v1092
      %v1094 = vrot.slane %v1093, 1
      %v1095 = vadd.f32 %v1093, %v1094
      %v1096 = vmul.f32 %v1039, %v1039
      %v1097 = vmul.f32 %v1041, %v1041
      %v1098 = vmul.f32 %v1044, %v1044
      %v1099 = vmul.f32 %v1046, %v1046
      %v1100 = vmul.f32 %v1049, %v1049
      %v1101 = vmul.f32 %v1051, %v1051
      %v1102 = vmul.f32 %v1054, %v1054
      %v1103 = vmul.f32 %v1056, %v1056
      %v1104 = vsel %vm812, %v1096, 0.0
      %v1105 = vsel %vm812, %v1097, 0.0
      %v1106 = vadd.f32 %v1104, %v1105
      %v1107 = vsel %vm812, %v1098, 0.0
      %v1108 = vadd.f32 %v1106, %v1107
      %v1109 = vsel %vm812, %v1099, 0.0
      %v1110 = vadd.f32 %v1108, %v1109
      %v1111 = vsel %vm812, %v1100, 0.0
      %v1112 = vadd.f32 %v1110, %v1111
      %v1113 = vsel %vm812, %v1101, 0.0
      %v1114 = vadd.f32 %v1112, %v1113
      %v1115 = vsel %vm812, %v1102, 0.0
      %v1116 = vadd.f32 %v1114, %v1115
      %v1117 = vsel %vm812, %v1103, 0.0
      %v1118 = vadd.f32 %v1116, %v1117
      %v1119 = vrot.slane %v1118, 4
      %v1120 = vadd.f32 %v1118, %v1119
      %v1121 = vrot.slane %v1120, 2
      %v1122 = vadd.f32 %v1120, %v1121
      %v1123 = vrot.slane %v1122, 1
      %v1124 = vadd.f32 %v1122, %v1123
      %vm1125 = vcmask 1040384
      %v1126 = vsel %vm1125, %v1095, %v1124
      %vm1127 = vcmask 58368
      %1128 = vst.msk [vmem:[%s280] sm:$0x3] %vm1127, %v1126
      %p1129 = scmp.lt.s32.totalorder %s21, 1
      %s1130 = scalar_select %p1129, %s21, 1
      %p1131 = scmp.lt.s32.totalorder %s22, 0
      %s1132 = scalar_select %p1131, %s22, 0
      %s1133 = smul.addr %s1130, 8
      %s1134 = sadd.s32 %s1132, %s1133
      %s1135 = smul.addr %s1134, 4
      %s1136 = scalar_lea.vmem %s4, %s1135
      %p1137 = scmp.lt.s32.totalorder %s21, 1
      %s1138 = scalar_select %p1137, %s21, 1
      %p1139 = scmp.lt.s32.totalorder %s22, 0
      %s1140 = scalar_select %p1139, %s22, 0
      %s1141 = sadd.s32 %s1140, %s1138
      %s1142 = smul.addr %s1141, 2
      %s1143 = scalar_lea.vmem %s5, %s1142
      // Predicated region
      $region37: #{_lambda_.4} parent=35 // pred_check
        %p1144 = pneg %p143
      $region38: #{_lambda_.4} parent=35 // pred_check_branch
        %1146 = sbr.rel (%p1144) target = $region40
      $region39: #{_lambda_.4} parent=35 // pred_region
        _
      $region40: #{_lambda_.4} parent=35 // pred_fallthru
        _
      // Predicated region
      $region41: #{_lambda_.4} parent=35 // pred_check
        %p1147 = pneg %p171
      $region42: #{_lambda_.4} parent=35 // pred_check_branch
        %1149 = sbr.rel (%p1147) target = $region44
      $region43: #{_lambda_.4} parent=35 // pred_region
        _
      $region44: #{_lambda_.4} parent=35 // pred_fallthru
        _
    $region36: #{_lambda_.4} parent=5 // pred_fallthru
      _
    %p1150 = scmp.le.s32.totalorder 2, %s12
    // Predicated region
    $region45: #{_lambda_.4} parent=5 // pred_check
      %p1151 = pneg %p1150
    $region46: #{_lambda_.4} parent=5 // pred_check_branch
      %1153 = sbr.rel (%p1151) target = $region48
    $region47: #{_lambda_.4} parent=5 // pred_region
      %s1154 = ssub.s32 %s12, 2
      // Predicated region
      $region49: #{_lambda_.4} parent=47 // pred_check
        %p1155 = pneg %p149
      $region50: #{_lambda_.4} parent=47 // pred_check_branch
        %1157 = sbr.rel (%p1155) target = $region52
      $region51: #{_lambda_.4} parent=47 // pred_region
        %p1158 = scmp.lt.s32.totalorder %s23, 1
        %s1159 = scalar_select %p1158, %s23, 1
        %p1160 = scmp.lt.s32.totalorder %s24, 0
        %s1161 = scalar_select %p1160, %s24, 0
        %s1162 = smul.addr %s1159, 8
        %s1163 = sadd.s32 %s1161, %s1162
        %s1164 = smul.addr %s1163, 4
        %s1165 = scalar_lea.vmem %s4, %s1164
      $region52: #{_lambda_.4} parent=47 // pred_fallthru
        _
      // Predicated region
      $region53: #{_lambda_.4} parent=47 // pred_check
        %p1166 = pneg %p177
      $region54: #{_lambda_.4} parent=47 // pred_check_branch
        %1168 = sbr.rel (%p1166) target = $region56
      $region55: #{_lambda_.4} parent=47 // pred_region
        %p1169 = scmp.lt.s32.totalorder %s23, 1
        %s1170 = scalar_select %p1169, %s23, 1
        %p1171 = scmp.lt.s32.totalorder %s24, 0
        %s1172 = scalar_select %p1171, %s24, 0
        %s1173 = sadd.s32 %s1172, %s1170
        %s1174 = smul.addr %s1173, 2
        %s1175 = scalar_lea.vmem %s5, %s1174
      $region56: #{_lambda_.4} parent=47 // pred_fallthru
        _
    $region48: #{_lambda_.4} parent=5 // pred_fallthru
      _
  $region6: #{_lambda_.4} parent=0 // loop_footer
    %s16 = sadd.s32 1, %s12
  $region7: #{_lambda_.4} parent=0 // loop_footer_branch
    %11 = sbr.rel target = $region3
  $region8: #{_lambda_.4} parent=0 // loop_exit
    _

// kernel: _lambda_.3
$region0: #{_lambda_.3}
  #allocation0 [shape = 'u32[]', space=smem, size = 0x4, offset = 0x4, fixed_abs, tag = 'smem constant byte address 0x4 - core index']
  #allocation1 [shape = 'u32[72,128]{1,0:T(1,128)}', space=vmem, size = 0x9000, scoped, tag = 'internal scratch']
  %s0 = inlined_call_operand.vmem [shape: bf16[2,4,9,9,4], index: 0, kind: input, shape index: {}]
  %s1 = inlined_call_operand.vmem [shape: bf16[36,8], index: 1, kind: input, shape index: {}]
  %s2 = inlined_call_operand.vmem [shape: bf16[4,8], index: 2, kind: input, shape index: {}]
  %s3 = inlined_call_operand.vmem [shape: bf16[2,64,8], index: 3, kind: output, shape index: {0}]
  %s4 = inlined_call_operand.vmem [shape: bf16[2,64,8], index: 4, kind: output, shape index: {1}]
  %s5 = inlined_call_operand.vmem [shape: f32[2,4,8], index: 5, kind: output, shape index: {2}]
  %6 = xla_tuple %s3, %s4, %s5
  %s7 = sld [smem:[#allocation0]]
  $region61: #{_lambda_.3} parent=0
    _
  %s9 = ssub.s32 1, %s7
  %s10 = scalar_select 0, %s9, %s7
  loop: start=0, step=1, limit=4
  $region2: #{_lambda_.3} parent=0 // loop_pre_header
    _
  $region3: #{_lambda_.3} parent=0 // loop_header
    %s12 = sphi 0, %s16
    %p13 = scmp.ge.s32.totalorder %s12, 4
    %s19 = sphi 0, %s31
    %s20 = sphi 0, %s27
    %s21 = sphi 0, %s19
    %s22 = sphi 0, %s20
    %s23 = sphi 0, %s21
    %s24 = sphi 0, %s22
    %s34 = sphi 0, %s36
    %s37 = sphi 0, %s34
    %s38 = sphi 0, %s37
    %s54 = sphi 0, %s38
    %s60 = sphi 0, %s62
    %s63 = sphi 0, %s60
    %s64 = sphi 0, %s63
    %s80 = sphi 0, %s64
    %s86 = sphi 0, %s88
    %s89 = sphi 0, %s86
    %s90 = sphi 0, %s89
    %s106 = sphi 0, %s90
    %s114 = sphi 0, %s116
    %s117 = sphi 0, %s114
    %s118 = sphi 0, %s117
    %s134 = sphi 0, %s118
    %s142 = sphi 0, %s144
    %s145 = sphi 0, %s142
    %s146 = sphi 0, %s145
    %s162 = sphi 0, %s146
    %s170 = sphi 0, %s172
    %s173 = sphi 0, %s170
    %s174 = sphi 0, %s173
    %s190 = sphi 0, %s174
  $region4: #{_lambda_.3} parent=0 // loop_header_branch
    %15 = sbr.rel (%p13) target = $region8
  $region5: #{_lambda_.3} parent=0 // loop_body
    %s17 = ssub.s32 %s12, 1
    %s18 = ssub.s32 %s12, 2
    %s25 = sadd.s32 1, %s20
    %p26 = scmp.ge.s32.totalorder %s25, 1
    %s27 = scalar_select %p26, 0, %s25
    %s28 = sadd.s32 1, %s19
    %s29 = scalar_select %p26, %s28, %s19
    %p30 = scmp.ge.s32.totalorder %s29, 2
    %s31 = scalar_select %p30, 0, %s29
    %s32 = ssub.s32 %s19, %s31
    %p33 = scmp.eq.s32.totalorder %s32, 0
    %s35 = sadd.s32 %s34, 1
    %s36 = scalar_select %p33, %s34, %s35
    %p39 = pneg %p33
    %p40 = scmp.eq.s32.totalorder %s12, 1
    %p41 = por %p39, %p40
    %p42 = scmp.ne.s32.totalorder %s34, %s37
    %p43 = scmp.eq.s32.totalorder %s12, 0
    %p44 = por %p42, %p43
    %p45 = scmp.ne.s32.totalorder %s34, %s37
    %p46 = scmp.eq.s32.totalorder %s17, 1
    %p47 = por %p45, %p46
    %p48 = scmp.ne.s32.totalorder %s37, %s38
    %p49 = scmp.eq.s32.totalorder %s17, 0
    %p50 = por %p48, %p49
    %p51 = scmp.ne.s32.totalorder %s37, %s38
    %p52 = scmp.eq.s32.totalorder %s18, 1
    %p53 = por %p51, %p52
    %p55 = scmp.ne.s32.totalorder %s38, %s54
    %p56 = scmp.eq.s32.totalorder %s18, 0
    %p57 = por %p55, %p56
    %s58 = ssub.s32 %s20, %s27
    %p59 = scmp.eq.s32.totalorder %s58, 0
    %s61 = sadd.s32 %s60, 1
    %s62 = scalar_select %p59, %s60, %s61
    %p65 = pneg %p59
    %p66 = scmp.eq.s32.totalorder %s12, 1
    %p67 = por %p65, %p66
    %p68 = scmp.ne.s32.totalorder %s60, %s63
    %p69 = scmp.eq.s32.totalorder %s12, 0
    %p70 = por %p68, %p69
    %p71 = scmp.ne.s32.totalorder %s60, %s63
    %p72 = scmp.eq.s32.totalorder %s17, 1
    %p73 = por %p71, %p72
    %p74 = scmp.ne.s32.totalorder %s63, %s64
    %p75 = scmp.eq.s32.totalorder %s17, 0
    %p76 = por %p74, %p75
    %p77 = scmp.ne.s32.totalorder %s63, %s64
    %p78 = scmp.eq.s32.totalorder %s18, 1
    %p79 = por %p77, %p78
    %p81 = scmp.ne.s32.totalorder %s64, %s80
    %p82 = scmp.eq.s32.totalorder %s18, 0
    %p83 = por %p81, %p82
    %s84 = ssub.s32 %s20, %s27
    %p85 = scmp.eq.s32.totalorder %s84, 0
    %s87 = sadd.s32 %s86, 1
    %s88 = scalar_select %p85, %s86, %s87
    %p91 = pneg %p85
    %p92 = scmp.eq.s32.totalorder %s12, 1
    %p93 = por %p91, %p92
    %p94 = scmp.ne.s32.totalorder %s86, %s89
    %p95 = scmp.eq.s32.totalorder %s12, 0
    %p96 = por %p94, %p95
    %p97 = scmp.ne.s32.totalorder %s86, %s89
    %p98 = scmp.eq.s32.totalorder %s17, 1
    %p99 = por %p97, %p98
    %p100 = scmp.ne.s32.totalorder %s89, %s90
    %p101 = scmp.eq.s32.totalorder %s17, 0
    %p102 = por %p100, %p101
    %p103 = scmp.ne.s32.totalorder %s89, %s90
    %p104 = scmp.eq.s32.totalorder %s18, 1
    %p105 = por %p103, %p104
    %p107 = scmp.ne.s32.totalorder %s90, %s106
    %p108 = scmp.eq.s32.totalorder %s18, 0
    %p109 = por %p107, %p108
    %s110 = ssub.s32 %s19, %s31
    %s111 = ssub.s32 %s20, %s27
    %s112 = sor.u32 %s110, %s111
    %p113 = scmp.eq.s32.totalorder %s112, 0
    %s115 = sadd.s32 %s114, 1
    %s116 = scalar_select %p113, %s114, %s115
    %p119 = pneg %p113
    %p120 = scmp.eq.s32.totalorder %s12, 1
    %p121 = por %p119, %p120
    %p122 = scmp.ne.s32.totalorder %s114, %s117
    %p123 = scmp.eq.s32.totalorder %s12, 0
    %p124 = por %p122, %p123
    %p125 = scmp.ne.s32.totalorder %s114, %s117
    %p126 = scmp.eq.s32.totalorder %s17, 1
    %p127 = por %p125, %p126
    %p128 = scmp.ne.s32.totalorder %s117, %s118
    %p129 = scmp.eq.s32.totalorder %s17, 0
    %p130 = por %p128, %p129
    %p131 = scmp.ne.s32.totalorder %s117, %s118
    %p132 = scmp.eq.s32.totalorder %s18, 1
    %p133 = por %p131, %p132
    %p135 = scmp.ne.s32.totalorder %s118, %s134
    %p136 = scmp.eq.s32.totalorder %s18, 0
    %p137 = por %p135, %p136
    %s138 = ssub.s32 %s19, %s31
    %s139 = ssub.s32 %s20, %s27
    %s140 = sor.u32 %s138, %s139
    %p141 = scmp.eq.s32.totalorder %s140, 0
    %s143 = sadd.s32 %s142, 1
    %s144 = scalar_select %p141, %s142, %s143
    %p147 = pneg %p141
    %p148 = scmp.eq.s32.totalorder %s12, 1
    %p149 = por %p147, %p148
    %p150 = scmp.ne.s32.totalorder %s142, %s145
    %p151 = scmp.eq.s32.totalorder %s12, 0
    %p152 = por %p150, %p151
    %p153 = scmp.ne.s32.totalorder %s142, %s145
    %p154 = scmp.eq.s32.totalorder %s17, 1
    %p155 = por %p153, %p154
    %p156 = scmp.ne.s32.totalorder %s145, %s146
    %p157 = scmp.eq.s32.totalorder %s17, 0
    %p158 = por %p156, %p157
    %p159 = scmp.ne.s32.totalorder %s145, %s146
    %p160 = scmp.eq.s32.totalorder %s18, 1
    %p161 = por %p159, %p160
    %p163 = scmp.ne.s32.totalorder %s146, %s162
    %p164 = scmp.eq.s32.totalorder %s18, 0
    %p165 = por %p163, %p164
    %s166 = ssub.s32 %s19, %s31
    %s167 = ssub.s32 %s20, %s27
    %s168 = sor.u32 %s166, %s167
    %p169 = scmp.eq.s32.totalorder %s168, 0
    %s171 = sadd.s32 %s170, 1
    %s172 = scalar_select %p169, %s170, %s171
    %p175 = pneg %p169
    %p176 = scmp.eq.s32.totalorder %s12, 1
    %p177 = por %p175, %p176
    %p178 = scmp.ne.s32.totalorder %s170, %s173
    %p179 = scmp.eq.s32.totalorder %s12, 0
    %p180 = por %p178, %p179
    %p181 = scmp.ne.s32.totalorder %s170, %s173
    %p182 = scmp.eq.s32.totalorder %s17, 1
    %p183 = por %p181, %p182
    %p184 = scmp.ne.s32.totalorder %s173, %s174
    %p185 = scmp.eq.s32.totalorder %s17, 0
    %p186 = por %p184, %p185
    %p187 = scmp.ne.s32.totalorder %s173, %s174
    %p188 = scmp.eq.s32.totalorder %s18, 1
    %p189 = por %p187, %p188
    %p191 = scmp.ne.s32.totalorder %s174, %s190
    %p192 = scmp.eq.s32.totalorder %s18, 0
    %p193 = por %p191, %p192
    %p194 = scmp.le.s32.totalorder 1, %s12
    %p195 = scmp.lt.s32.totalorder %s12, 3
    %p196 = pnand %p194, %p195
    %p197 = pneg %p196
    // Predicated region
    $region9: #{_lambda_.3} parent=5 // pred_check
      _
    $region10: #{_lambda_.3} parent=5 // pred_check_branch
      %199 = sbr.rel (%p196) target = $region12
    $region11: #{_lambda_.3} parent=5 // pred_region
      %s200 = ssub.s32 %s12, 1
      // Predicated region
      $region13: #{_lambda_.3} parent=11 // pred_check
        %p201 = pneg %p76
      $region14: #{_lambda_.3} parent=11 // pred_check_branch
        %203 = sbr.rel (%p201) target = $region16
      $region15: #{_lambda_.3} parent=11 // pred_region
        %p204 = scmp.lt.s32.totalorder %s22, 0
        %s205 = scalar_select %p204, %s22, 0
        %s206 = smul.addr %s205, 4
        %s207 = scalar_lea.vmem %s1, %s206
      $region16: #{_lambda_.3} parent=11 // pred_fallthru
        _
      // Predicated region
      $region17: #{_lambda_.3} parent=11 // pred_check
        %p208 = pneg %p102
      $region18: #{_lambda_.3} parent=11 // pred_check_branch
        %210 = sbr.rel (%p208) target = $region20
      $region19: #{_lambda_.3} parent=11 // pred_region
        %p211 = scmp.lt.s32.totalorder %s22, 0
        %s212 = scalar_select %p211, %s22, 0
        %s213 = smul.addr %s212, 2
        %s214 = scalar_lea.vmem %s2, %s213
      $region20: #{_lambda_.3} parent=11 // pred_fallthru
        _
    $region12: #{_lambda_.3} parent=5 // pred_fallthru
      _
    %p215 = scmp.lt.s32.totalorder %s12, 2
    // Predicated region
    $region21: #{_lambda_.3} parent=5 // pred_check
      %p216 = pneg %p215
    $region22: #{_lambda_.3} parent=5 // pred_check_branch
      %218 = sbr.rel (%p216) target = $region24
    $region23: #{_lambda_.3} parent=5 // pred_region
      // Predicated region
      $region25: #{_lambda_.3} parent=23 // pred_check
        %p219 = pneg %p44
      $region26: #{_lambda_.3} parent=23 // pred_check_branch
        %221 = sbr.rel (%p219) target = $region28
      $region27: #{_lambda_.3} parent=23 // pred_region
        %p222 = scmp.lt.s32.totalorder %s19, 1
        %s223 = scalar_select %p222, %s19, 1
        %s224 = smul.addr %s223, 72
        %s225 = smul.addr %s224, 4
        %s226 = scalar_lea.vmem %s0, %s225
      $region28: #{_lambda_.3} parent=23 // pred_fallthru
        _
    $region24: #{_lambda_.3} parent=5 // pred_fallthru
      _
    %p227 = scmp.le.s32.totalorder 1, %s12
    %p228 = scmp.lt.s32.totalorder %s12, 3
    %p229 = pnand %p227, %p228
    %p230 = pneg %p229
    // Predicated region
    $region29: #{_lambda_.3} parent=5 // pred_check
      _
    $region30: #{_lambda_.3} parent=5 // pred_check_branch
      %232 = sbr.rel (%p229) target = $region32
    $region31: #{_lambda_.3} parent=5 // pred_region
      %s233 = ssub.s32 %s12, 1
      %p234 = scmp.lt.s32.totalorder %s21, 1
      %s235 = scalar_select %p234, %s21, 1
      %s236 = smul.addr %s235, 72
      %s237 = smul.addr %s236, 4
      %s238 = scalar_lea.vmem %s0, %s237
      %p239 = pneg %p50
      %p240 = pneg %p47
      %p241 = scmp.lt.s32.totalorder %s22, 0
      %s242 = scalar_select %p241, %s22, 0
      %s243 = smul.addr %s242, 4
      %s244 = scalar_lea.vmem %s1, %s243
      %p245 = pneg %p76
      %p246 = pneg %p73
      %p247 = scmp.lt.s32.totalorder %s22, 0
      %s248 = scalar_select %p247, %s22, 0
      %s249 = smul.addr %s248, 2
      %s250 = scalar_lea.vmem %s2, %s249
      %p251 = pneg %p102
      %p252 = pneg %p99
      %p253 = pneg %p130
      %p254 = pneg %p127
      %p255 = scmp.lt.s32.totalorder %s21, 1
      %s256 = scalar_select %p255, %s21, 1
      %p257 = scmp.lt.s32.totalorder %s22, 0
      %s258 = scalar_select %p257, %s22, 0
      %s259 = smul.addr %s256, 8
      %s260 = sadd.s32 %s258, %s259
      %s261 = smul.addr %s260, 4
      %s262 = scalar_lea.vmem %s3, %s261
      %p263 = pneg %p158
      %p264 = pneg %p155
      %p265 = scmp.lt.s32.totalorder %s21, 1
      %s266 = scalar_select %p265, %s21, 1
      %p267 = scmp.lt.s32.totalorder %s22, 0
      %s268 = scalar_select %p267, %s22, 0
      %s269 = smul.addr %s266, 8
      %s270 = sadd.s32 %s268, %s269
      %s271 = smul.addr %s270, 4
      %s272 = scalar_lea.vmem %s4, %s271
      %p273 = pneg %p186
      %p274 = pneg %p183
      %p275 = scmp.lt.s32.totalorder %s21, 1
      %s276 = scalar_select %p275, %s21, 1
      %p277 = scmp.lt.s32.totalorder %s22, 0
      %s278 = scalar_select %p277, %s22, 0
      %s279 = sadd.s32 %s278, %s276
      %s280 = smul.addr %s279, 4
      %s281 = scalar_lea.vmem %s5, %s280
      %p282 = scmp.lt.s32.totalorder %s21, 1
      %s283 = scalar_select %p282, %s21, 1
      %s284 = smul.addr %s283, 72
      %s285 = smul.addr %s284, 4
      %s286 = scalar_lea.vmem %s0, %s285
      %p287 = scmp.lt.s32.totalorder %s22, 0
      %s288 = scalar_select %p287, %s22, 0
      %s289 = smul.addr %s288, 4
      %s290 = scalar_lea.vmem %s1, %s289
      %p291 = scmp.lt.s32.totalorder %s22, 0
      %s292 = scalar_select %p291, %s22, 0
      %s293 = smul.addr %s292, 2
      %s294 = scalar_lea.vmem %s2, %s293
      %p295 = scmp.lt.s32.totalorder %s21, 1
      %s296 = scalar_select %p295, %s21, 1
      %p297 = scmp.lt.s32.totalorder %s22, 0
      %s298 = scalar_select %p297, %s22, 0
      %s299 = smul.addr %s296, 8
      %s300 = sadd.s32 %s298, %s299
      %s301 = smul.addr %s300, 4
      %s302 = scalar_lea.vmem %s3, %s301
      %p303 = scmp.lt.s32.totalorder %s21, 1
      %s304 = scalar_select %p303, %s21, 1
      %p305 = scmp.lt.s32.totalorder %s22, 0
      %s306 = scalar_select %p305, %s22, 0
      %s307 = smul.addr %s304, 8
      %s308 = sadd.s32 %s306, %s307
      %s309 = smul.addr %s308, 4
      %s310 = scalar_lea.vmem %s4, %s309
      %p311 = scmp.lt.s32.totalorder %s21, 1
      %s312 = scalar_select %p311, %s21, 1
      %p313 = scmp.lt.s32.totalorder %s22, 0
      %s314 = scalar_select %p313, %s22, 0
      %s315 = sadd.s32 %s314, %s312
      %s316 = smul.addr %s315, 4
      %s317 = scalar_lea.vmem %s5, %s316
      %v319 = vld [vmem:[%s286] sm:$0xf]
      %v320 = vld [vmem:[%s286 + $0x8] sm:$0xf]
      %v321 = vld [vmem:[%s286 + $0x10] sm:$0xf]
      %v322 = vld [vmem:[%s286 + $0x18] sm:$0xf]
      %v323 = vld [vmem:[%s286 + $0x20] sm:$0xf]
      %v324 = vld [vmem:[%s286 + $0x28] sm:$0xf]
      %v325 = vld [vmem:[%s286 + $0x30] sm:$0xf]
      %v326 = vld [vmem:[%s286 + $0x38] sm:$0xf]
      %s327 = scalar_lea.vmem %s286, 72
      %v328 = vld [vmem:[%s327] sm:$0xf]
      %v329 = vld [vmem:[%s327 + $0x8] sm:$0xf]
      %v330 = vld [vmem:[%s327 + $0x10] sm:$0xf]
      %v331 = vld [vmem:[%s327 + $0x18] sm:$0xf]
      %v332 = vld [vmem:[%s327 + $0x20] sm:$0xf]
      %v333 = vld [vmem:[%s327 + $0x28] sm:$0xf]
      %v334 = vld [vmem:[%s327 + $0x30] sm:$0xf]
      %v335 = vld [vmem:[%s327 + $0x38] sm:$0xf]
      %v336 = vld [vmem:[%s286 + $0x4] sm:$0x1]
      %v337 = vld [vmem:[%s286 + $0xc] sm:$0x1]
      %v338 = vld [vmem:[%s286 + $0x14] sm:$0x1]
      %v339 = vld [vmem:[%s286 + $0x1c] sm:$0x1]
      %v340 = vld [vmem:[%s286 + $0x24] sm:$0x1]
      %v341 = vld [vmem:[%s286 + $0x2c] sm:$0x1]
      %v342 = vld [vmem:[%s286 + $0x34] sm:$0x1]
      %v343 = vld [vmem:[%s286 + $0x3c] sm:$0x1]
      %s344 = scalar_lea.vmem %s286, 144
      %v345 = vld [vmem:[%s344] sm:$0xf]
      %v346 = vld [vmem:[%s344 + $0x8] sm:$0xf]
      %v347 = vld [vmem:[%s344 + $0x10] sm:$0xf]
      %v348 = vld [vmem:[%s344 + $0x18] sm:$0xf]
      %v349 = vld [vmem:[%s344 + $0x20] sm:$0xf]
      %v350 = vld [vmem:[%s344 + $0x28] sm:$0xf]
      %v351 = vld [vmem:[%s344 + $0x30] sm:$0xf]
      %v352 = vld [vmem:[%s344 + $0x38] sm:$0xf]
      %s353 = scalar_lea.vmem %s286, 216
      %v354 = vld [vmem:[%s353] sm:$0xf]
      %v355 = vld [vmem:[%s353 + $0x8] sm:$0xf]
      %v356 = vld [vmem:[%s353 + $0x10] sm:$0xf]
      %v357 = vld [vmem:[%s353 + $0x18] sm:$0xf]
      %v358 = vld [vmem:[%s353 + $0x20] sm:$0xf]
      %v359 = vld [vmem:[%s353 + $0x28] sm:$0xf]
      %v360 = vld [vmem:[%s353 + $0x30] sm:$0xf]
      %v361 = vld [vmem:[%s353 + $0x38] sm:$0xf]
      %v362 = vld [vmem:[%s344 + $0x4] sm:$0x1]
      %v363 = vld [vmem:[%s344 + $0xc] sm:$0x1]
      %v364 = vld [vmem:[%s344 + $0x14] sm:$0x1]
      %v365 = vld [vmem:[%s344 + $0x1c] sm:$0x1]
      %v366 = vld [vmem:[%s344 + $0x24] sm:$0x1]
      %v367 = vld [vmem:[%s344 + $0x2c] sm:$0x1]
      %v368 = vld [vmem:[%s344 + $0x34] sm:$0x1]
      %v369 = vld [vmem:[%s344 + $0x3c] sm:$0x1]
      %s370 = scalar_lea.vmem %s286, 8
      %v371 = vld [vmem:[%s370] sm:$0xf]
      %v372 = vld [vmem:[%s370 + $0x8] sm:$0xf]
      %v373 = vld [vmem:[%s370 + $0x10] sm:$0xf]
      %v374 = vld [vmem:[%s370 + $0x18] sm:$0xf]
      %v375 = vld [vmem:[%s370 + $0x20] sm:$0xf]
      %v376 = vld [vmem:[%s370 + $0x28] sm:$0xf]
      %v377 = vld [vmem:[%s370 + $0x30] sm:$0xf]
      %v378 = vld [vmem:[%s370 + $0x38] sm:$0xf]
      %s379 = scalar_lea.vmem %s286, 80
      %v380 = vld [vmem:[%s379] sm:$0xf]
      %v381 = vld [vmem:[%s379 + $0x8] sm:$0xf]
      %v382 = vld [vmem:[%s379 + $0x10] sm:$0xf]
      %v383 = vld [vmem:[%s379 + $0x18] sm:$0xf]
      %v384 = vld [vmem:[%s379 + $0x20] sm:$0xf]
      %v385 = vld [vmem:[%s379 + $0x28] sm:$0xf]
      %v386 = vld [vmem:[%s379 + $0x30] sm:$0xf]
      %v387 = vld [vmem:[%s379 + $0x38] sm:$0xf]
      %v388 = vld [vmem:[%s370 + $0x4] sm:$0x1]
      %v389 = vld [vmem:[%s370 + $0xc] sm:$0x1]
      %v390 = vld [vmem:[%s370 + $0x14] sm:$0x1]
      %v391 = vld [vmem:[%s370 + $0x1c] sm:$0x1]
      %v392 = vld [vmem:[%s370 + $0x24] sm:$0x1]
      %v393 = vld [vmem:[%s370 + $0x2c] sm:$0x1]
      %v394 = vld [vmem:[%s370 + $0x34] sm:$0x1]
      %v395 = vld [vmem:[%s370 + $0x3c] sm:$0x1]
      %v404 = vunpack.c.l.b16 %v328
      %v405 = vunpack.c.l.b16 %v329
      %v406 = vunpack.c.l.b16 %v330
      %v407 = vunpack.c.l.b16 %v331
      %v408 = vunpack.c.l.b16 %v332
      %v409 = vunpack.c.l.b16 %v333
      %v410 = vunpack.c.l.b16 %v334
      %v411 = vunpack.c.l.b16 %v335
      %v412 = vpack.c.b16 %v404, %v404
      %v413 = vpack.c.b16 %v405, %v405
      %v414 = vpack.c.b16 %v406, %v406
      %v415 = vpack.c.b16 %v407, %v407
      %v416 = vpack.c.b16 %v408, %v408
      %v417 = vpack.c.b16 %v409, %v409
      %v418 = vpack.c.b16 %v410, %v410
      %v419 = vpack.c.b16 %v411, %v411
      %420 = vrot.lane.b32.xlu0 %v412, 4
      %v421 = vpop.permute.xlu0 %420
      %422 = vrot.lane.b32.xlu0 %v413, 4
      %v423 = vpop.permute.xlu0 %422
      %424 = vrot.lane.b32.xlu0 %v414, 4
      %v425 = vpop.permute.xlu0 %424
      %426 = vrot.lane.b32.xlu0 %v415, 4
      %v427 = vpop.permute.xlu0 %426
      %428 = vrot.lane.b32.xlu0 %v416, 4
      %v429 = vpop.permute.xlu0 %428
      %430 = vrot.lane.b32.xlu0 %v417, 4
      %v431 = vpop.permute.xlu0 %430
      %432 = vrot.lane.b32.xlu0 %v418, 4
      %v433 = vpop.permute.xlu0 %432
      %434 = vrot.lane.b32.xlu0 %v419, 4
      %v435 = vpop.permute.xlu0 %434
      %v452 = vunpack.c.l.b16 %v319
      %v453 = vunpack.c.l.b16 %v336
      %v454 = vunpack.c.l.b16 %v320
      %v455 = vunpack.c.l.b16 %v337
      %v456 = vunpack.c.l.b16 %v321
      %v457 = vunpack.c.l.b16 %v338
      %v458 = vunpack.c.l.b16 %v322
      %v459 = vunpack.c.l.b16 %v339
      %v460 = vunpack.c.l.b16 %v323
      %v461 = vunpack.c.l.b16 %v340
      %v462 = vunpack.c.l.b16 %v324
      %v463 = vunpack.c.l.b16 %v341
      %v464 = vunpack.c.l.b16 %v325
      %v465 = vunpack.c.l.b16 %v342
      %v466 = vunpack.c.l.b16 %v326
      %v467 = vunpack.c.l.b16 %v343
      %v468 = vpack.c.b16 %v453, %v452
      %v469 = vpack.c.b16 %v455, %v454
      %v470 = vpack.c.b16 %v457, %v456
      %v471 = vpack.c.b16 %v459, %v458
      %v472 = vpack.c.b16 %v461, %v460
      %v473 = vpack.c.b16 %v463, %v462
      %v474 = vpack.c.b16 %v465, %v464
      %v475 = vpack.c.b16 %v467, %v466
      %v477 = vshrl.u32 %v468, 16
      %v479 = vshll.u32 %v468, 16
      %v481 = vrot.slane %v479, 1
      %v482 = vor.u32 %v477, %v481
      %v484 = vshrl.u32 %v469, 16
      %v486 = vshll.u32 %v469, 16
      %v488 = vrot.slane %v486, 1
      %v489 = vor.u32 %v484, %v488
      %v491 = vshrl.u32 %v470, 16
      %v493 = vshll.u32 %v470, 16
      %v495 = vrot.slane %v493, 1
      %v496 = vor.u32 %v491, %v495
      %v498 = vshrl.u32 %v471, 16
      %v500 = vshll.u32 %v471, 16
      %v502 = vrot.slane %v500, 1
      %v503 = vor.u32 %v498, %v502
      %v505 = vshrl.u32 %v472, 16
      %v507 = vshll.u32 %v472, 16
      %v509 = vrot.slane %v507, 1
      %v510 = vor.u32 %v505, %v509
      %v512 = vshrl.u32 %v473, 16
      %v514 = vshll.u32 %v473, 16
      %v516 = vrot.slane %v514, 1
      %v517 = vor.u32 %v512, %v516
      %v519 = vshrl.u32 %v474, 16
      %v521 = vshll.u32 %v474, 16
      %v523 = vrot.slane %v521, 1
      %v524 = vor.u32 %v519, %v523
      %v526 = vshrl.u32 %v475, 16
      %v528 = vshll.u32 %v475, 16
      %v530 = vrot.slane %v528, 1
      %v531 = vor.u32 %v526, %v530
      %532 = vrot.lane.b32.xlu0 %v482, 8
      %v533 = vpop.permute.xlu0 %532
      %534 = vrot.lane.b32.xlu0 %v489, 8
      %v535 = vpop.permute.xlu0 %534
      %536 = vrot.lane.b32.xlu0 %v496, 8
      %v537 = vpop.permute.xlu0 %536
      %538 = vrot.lane.b32.xlu0 %v503, 8
      %v539 = vpop.permute.xlu0 %538
      %540 = vrot.lane.b32.xlu0 %v510, 8
      %v541 = vpop.permute.xlu0 %540
      %542 = vrot.lane.b32.xlu0 %v517, 8
      %v543 = vpop.permute.xlu0 %542
      %544 = vrot.lane.b32.xlu0 %v524, 8
      %v545 = vpop.permute.xlu0 %544
      %546 = vrot.lane.b32.xlu0 %v531, 8
      %v547 = vpop.permute.xlu0 %546
      %v556 = vunpack.c.l.b16 %v345
      %v557 = vunpack.c.l.b16 %v346
      %v558 = vunpack.c.l.b16 %v347
      %v559 = vunpack.c.l.b16 %v348
      %v560 = vunpack.c.l.b16 %v349
      %v561 = vunpack.c.l.b16 %v350
      %v562 = vunpack.c.l.b16 %v351
      %v563 = vunpack.c.l.b16 %v352
      %v564 = vpack.c.b16 %v556, %v556
      %v565 = vpack.c.b16 %v557, %v557
      %v566 = vpack.c.b16 %v558, %v558
      %v567 = vpack.c.b16 %v559, %v559
      %v568 = vpack.c.b16 %v560, %v560
      %v569 = vpack.c.b16 %v561, %v561
      %v570 = vpack.c.b16 %v562, %v562
      %v571 = vpack.c.b16 %v563, %v563
      %572 = vrot.lane.b32.xlu0 %v564, 12
      %v573 = vpop.permute.xlu0 %572
      %574 = vrot.lane.b32.xlu0 %v565, 12
      %v575 = vpop.permute.xlu0 %574
      %576 = vrot.lane.b32.xlu0 %v566, 12
      %v577 = vpop.permute.xlu0 %576
      %578 = vrot.lane.b32.xlu0 %v567, 12
      %v579 = vpop.permute.xlu0 %578
      %580 = vrot.lane.b32.xlu0 %v568, 12
      %v581 = vpop.permute.xlu0 %580
      %582 = vrot.lane.b32.xlu0 %v569, 12
      %v583 = vpop.permute.xlu0 %582
      %584 = vrot.lane.b32.xlu0 %v570, 12
      %v585 = vpop.permute.xlu0 %584
      %586 = vrot.lane.b32.xlu0 %v571, 12
      %v587 = vpop.permute.xlu0 %586
      %v596 = vunpack.c.l.b16 %v354
      %v597 = vunpack.c.l.b16 %v355
      %v598 = vunpack.c.l.b16 %v356
      %v599 = vunpack.c.l.b16 %v357
      %v600 = vunpack.c.l.b16 %v358
      %v601 = vunpack.c.l.b16 %v359
      %v602 = vunpack.c.l.b16 %v360
      %v603 = vunpack.c.l.b16 %v361
      %v604 = vpack.c.b16 %v596, %v596
      %v605 = vpack.c.b16 %v597, %v597
      %v606 = vpack.c.b16 %v598, %v598
      %v607 = vpack.c.b16 %v599, %v599
      %v608 = vpack.c.b16 %v600, %v600
      %v609 = vpack.c.b16 %v601, %v601
      %v610 = vpack.c.b16 %v602, %v602
      %v611 = vpack.c.b16 %v603, %v603
      %612 = vrot.lane.b32.xlu0 %v604, 16
      %v613 = vpop.permute.xlu0 %612
      %614 = vrot.lane.b32.xlu0 %v605, 16
      %v615 = vpop.permute.xlu0 %614
      %616 = vrot.lane.b32.xlu0 %v606, 16
      %v617 = vpop.permute.xlu0 %616
      %618 = vrot.lane.b32.xlu0 %v607, 16
      %v619 = vpop.permute.xlu0 %618
      %620 = vrot.lane.b32.xlu0 %v608, 16
      %v621 = vpop.permute.xlu0 %620
      %622 = vrot.lane.b32.xlu0 %v609, 16
      %v623 = vpop.permute.xlu0 %622
      %624 = vrot.lane.b32.xlu0 %v610, 16
      %v625 = vpop.permute.xlu0 %624
      %626 = vrot.lane.b32.xlu0 %v611, 16
      %v627 = vpop.permute.xlu0 %626
      %v636 = vunpack.c.l.b16 %v362
      %v637 = vunpack.c.l.b16 %v363
      %v638 = vunpack.c.l.b16 %v364
      %v639 = vunpack.c.l.b16 %v365
      %v640 = vunpack.c.l.b16 %v366
      %v641 = vunpack.c.l.b16 %v367
      %v642 = vunpack.c.l.b16 %v368
      %v643 = vunpack.c.l.b16 %v369
      %v644 = vpack.c.b16 %v636, %v556
      %v645 = vpack.c.b16 %v637, %v557
      %v646 = vpack.c.b16 %v638, %v558
      %v647 = vpack.c.b16 %v639, %v559
      %v648 = vpack.c.b16 %v640, %v560
      %v649 = vpack.c.b16 %v641, %v561
      %v650 = vpack.c.b16 %v642, %v562
      %v651 = vpack.c.b16 %v643, %v563
      %v653 = vshrl.u32 %v644, 16
      %v655 = vshll.u32 %v644, 16
      %v657 = vrot.slane %v655, 1
      %v658 = vor.u32 %v653, %v657
      %v660 = vshrl.u32 %v645, 16
      %v662 = vshll.u32 %v645, 16
      %v664 = vrot.slane %v662, 1
      %v665 = vor.u32 %v660, %v664
      %v667 = vshrl.u32 %v646, 16
      %v669 = vshll.u32 %v646, 16
      %v671 = vrot.slane %v669, 1
      %v672 = vor.u32 %v667, %v671
      %v674 = vshrl.u32 %v647, 16
      %v676 = vshll.u32 %v647, 16
      %v678 = vrot.slane %v676, 1
      %v679 = vor.u32 %v674, %v678
      %v681 = vshrl.u32 %v648, 16
      %v683 = vshll.u32 %v648, 16
      %v685 = vrot.slane %v683, 1
      %v686 = vor.u32 %v681, %v685
      %v688 = vshrl.u32 %v649, 16
      %v690 = vshll.u32 %v649, 16
      %v692 = vrot.slane %v690, 1
      %v693 = vor.u32 %v688, %v692
      %v695 = vshrl.u32 %v650, 16
      %v697 = vshll.u32 %v650, 16
      %v699 = vrot.slane %v697, 1
      %v700 = vor.u32 %v695, %v699
      %v702 = vshrl.u32 %v651, 16
      %v704 = vshll.u32 %v651, 16
      %v706 = vrot.slane %v704, 1
      %v707 = vor.u32 %v702, %v706
      %708 = vrot.lane.b32.xlu0 %v658, 20
      %v709 = vpop.permute.xlu0 %708
      %710 = vrot.lane.b32.xlu0 %v665, 20
      %v711 = vpop.permute.xlu0 %710
      %712 = vrot.lane.b32.xlu0 %v672, 20
      %v713 = vpop.permute.xlu0 %712
      %714 = vrot.lane.b32.xlu0 %v679, 20
      %v715 = vpop.permute.xlu0 %714
      %716 = vrot.lane.b32.xlu0 %v686, 20
      %v717 = vpop.permute.xlu0 %716
      %718 = vrot.lane.b32.xlu0 %v693, 20
      %v719 = vpop.permute.xlu0 %718
      %720 = vrot.lane.b32.xlu0 %v700, 20
      %v721 = vpop.permute.xlu0 %720
      %722 = vrot.lane.b32.xlu0 %v707, 20
      %v723 = vpop.permute.xlu0 %722
      %v732 = vunpack.c.l.b16 %v371
      %v733 = vunpack.c.l.b16 %v372
      %v734 = vunpack.c.l.b16 %v373
      %v735 = vunpack.c.l.b16 %v374
      %v736 = vunpack.c.l.b16 %v375
      %v737 = vunpack.c.l.b16 %v376
      %v738 = vunpack.c.l.b16 %v377
      %v739 = vunpack.c.l.b16 %v378
      %v740 = vpack.c.b16 %v732, %v732
      %v741 = vpack.c.b16 %v733, %v733
      %v742 = vpack.c.b16 %v734, %v734
      %v743 = vpack.c.b16 %v735, %v735
      %v744 = vpack.c.b16 %v736, %v736
      %v745 = vpack.c.b16 %v737, %v737
      %v746 = vpack.c.b16 %v738, %v738
      %v747 = vpack.c.b16 %v739, %v739
      %748 = vrot.lane.b32.xlu0 %v740, 24
      %v749 = vpop.permute.xlu0 %748
      %750 = vrot.lane.b32.xlu0 %v741, 24
      %v751 = vpop.permute.xlu0 %750
      %752 = vrot.lane.b32.xlu0 %v742, 24
      %v753 = vpop.permute.xlu0 %752
      %754 = vrot.lane.b32.xlu0 %v743, 24
      %v755 = vpop.permute.xlu0 %754
      %756 = vrot.lane.b32.xlu0 %v744, 24
      %v757 = vpop.permute.xlu0 %756
      %758 = vrot.lane.b32.xlu0 %v745, 24
      %v759 = vpop.permute.xlu0 %758
      %760 = vrot.lane.b32.xlu0 %v746, 24
      %v761 = vpop.permute.xlu0 %760
      %762 = vrot.lane.b32.xlu0 %v747, 24
      %v763 = vpop.permute.xlu0 %762
      %v772 = vunpack.c.l.b16 %v380
      %v773 = vunpack.c.l.b16 %v381
      %v774 = vunpack.c.l.b16 %v382
      %v775 = vunpack.c.l.b16 %v383
      %v776 = vunpack.c.l.b16 %v384
      %v777 = vunpack.c.l.b16 %v385
      %v778 = vunpack.c.l.b16 %v386
      %v779 = vunpack.c.l.b16 %v387
      %v780 = vpack.c.b16 %v772, %v772
      %v781 = vpack.c.b16 %v773, %v773
      %v782 = vpack.c.b16 %v774, %v774
      %v783 = vpack.c.b16 %v775, %v775
      %v784 = vpack.c.b16 %v776, %v776
      %v785 = vpack.c.b16 %v777, %v777
      %v786 = vpack.c.b16 %v778, %v778
      %v787 = vpack.c.b16 %v779, %v779
      %788 = vrot.lane.b32.xlu0 %v780, 28
      %v789 = vpop.permute.xlu0 %788
      %790 = vrot.lane.b32.xlu0 %v781, 28
      %v791 = vpop.permute.xlu0 %790
      %792 = vrot.lane.b32.xlu0 %v782, 28
      %v793 = vpop.permute.xlu0 %792
      %794 = vrot.lane.b32.xlu0 %v783, 28
      %v795 = vpop.permute.xlu0 %794
      %796 = vrot.lane.b32.xlu0 %v784, 28
      %v797 = vpop.permute.xlu0 %796
      %798 = vrot.lane.b32.xlu0 %v785, 28
      %v799 = vpop.permute.xlu0 %798
      %800 = vrot.lane.b32.xlu0 %v786, 28
      %v801 = vpop.permute.xlu0 %800
      %802 = vrot.lane.b32.xlu0 %v787, 28
      %v803 = vpop.permute.xlu0 %802
      %v812 = vunpack.c.l.b16 %v388
      %v813 = vunpack.c.l.b16 %v389
      %v814 = vunpack.c.l.b16 %v390
      %v815 = vunpack.c.l.b16 %v391
      %v816 = vunpack.c.l.b16 %v392
      %v817 = vunpack.c.l.b16 %v393
      %v818 = vunpack.c.l.b16 %v394
      %v819 = vunpack.c.l.b16 %v395
      %v820 = vpack.c.b16 %v812, %v732
      %v821 = vpack.c.b16 %v813, %v733
      %v822 = vpack.c.b16 %v814, %v734
      %v823 = vpack.c.b16 %v815, %v735
      %v824 = vpack.c.b16 %v816, %v736
      %v825 = vpack.c.b16 %v817, %v737
      %v826 = vpack.c.b16 %v818, %v738
      %v827 = vpack.c.b16 %v819, %v739
      %v829 = vshrl.u32 %v820, 16
      %v831 = vshll.u32 %v820, 16
      %v833 = vrot.slane %v831, 1
      %v834 = vor.u32 %v829, %v833
      %v836 = vshrl.u32 %v821, 16
      %v838 = vshll.u32 %v821, 16
      %v840 = vrot.slane %v838, 1
      %v841 = vor.u32 %v836, %v840
      %v843 = vshrl.u32 %v822, 16
      %v845 = vshll.u32 %v822, 16
      %v847 = vrot.slane %v845, 1
      %v848 = vor.u32 %v843, %v847
      %v850 = vshrl.u32 %v823, 16
      %v852 = vshll.u32 %v823, 16
      %v854 = vrot.slane %v852, 1
      %v855 = vor.u32 %v850, %v854
      %v857 = vshrl.u32 %v824, 16
      %v859 = vshll.u32 %v824, 16
      %v861 = vrot.slane %v859, 1
      %v862 = vor.u32 %v857, %v861
      %v864 = vshrl.u32 %v825, 16
      %v866 = vshll.u32 %v825, 16
      %v868 = vrot.slane %v866, 1
      %v869 = vor.u32 %v864, %v868
      %v871 = vshrl.u32 %v826, 16
      %v873 = vshll.u32 %v826, 16
      %v875 = vrot.slane %v873, 1
      %v876 = vor.u32 %v871, %v875
      %v878 = vshrl.u32 %v827, 16
      %v880 = vshll.u32 %v827, 16
      %v882 = vrot.slane %v880, 1
      %v883 = vor.u32 %v878, %v882
      %884 = vrot.lane.b32.xlu0 %v834, 32
      %v885 = vpop.permute.xlu0 %884
      %886 = vrot.lane.b32.xlu0 %v841, 32
      %v887 = vpop.permute.xlu0 %886
      %888 = vrot.lane.b32.xlu0 %v848, 32
      %v889 = vpop.permute.xlu0 %888
      %890 = vrot.lane.b32.xlu0 %v855, 32
      %v891 = vpop.permute.xlu0 %890
      %892 = vrot.lane.b32.xlu0 %v862, 32
      %v893 = vpop.permute.xlu0 %892
      %894 = vrot.lane.b32.xlu0 %v869, 32
      %v895 = vpop.permute.xlu0 %894
      %896 = vrot.lane.b32.xlu0 %v876, 32
      %v897 = vpop.permute.xlu0 %896
      %898 = vrot.lane.b32.xlu0 %v883, 32
      %v899 = vpop.permute.xlu0 %898
      %vm900 = vcmask 31744
      %v903 = vsel %vm900, %v319, %v421
      %v906 = vsel %vm900, %v320, %v423
      %v909 = vsel %vm900, %v321, %v425
      %v912 = vsel %vm900, %v322, %v427
      %v915 = vsel %vm900, %v323, %v429
      %v918 = vsel %vm900, %v324, %v431
      %v921 = vsel %vm900, %v325, %v433
      %v924 = vsel %vm900, %v326, %v435
      %vm925 = vcmask 64512
      %v927 = vsel %vm925, %v903, %v533
      %v929 = vsel %vm925, %v906, %v535
      %v931 = vsel %vm925, %v909, %v537
      %v933 = vsel %vm925, %v912, %v539
      %v935 = vsel %vm925, %v915, %v541
      %v937 = vsel %vm925, %v918, %v543
      %v939 = vsel %vm925, %v921, %v545
      %v941 = vsel %vm925, %v924, %v547
      %vm942 = vcmask 97280
      %v944 = vsel %vm942, %v927, %v573
      %v946 = vsel %vm942, %v929, %v575
      %v948 = vsel %vm942, %v931, %v577
      %v950 = vsel %vm942, %v933, %v579
      %v952 = vsel %vm942, %v935, %v581
      %v954 = vsel %vm942, %v937, %v583
      %v956 = vsel %vm942, %v939, %v585
      %v958 = vsel %vm942, %v941, %v587
      %vm959 = vcmask 130048
      %v961 = vsel %vm959, %v944, %v613
      %v963 = vsel %vm959, %v946, %v615
      %v965 = vsel %vm959, %v948, %v617
      %v967 = vsel %vm959, %v950, %v619
      %v969 = vsel %vm959, %v952, %v621
      %v971 = vsel %vm959, %v954, %v623
      %v973 = vsel %vm959, %v956, %v625
      %v975 = vsel %vm959, %v958, %v627
      %vm976 = vcmask 162816
      %v978 = vsel %vm976, %v961, %v709
      %v980 = vsel %vm976, %v963, %v711
      %v982 = vsel %vm976, %v965, %v713
      %v984 = vsel %vm976, %v967, %v715
      %v986 = vsel %vm976, %v969, %v717
      %v988 = vsel %vm976, %v971, %v719
      %v990 = vsel %vm976, %v973, %v721
      %v992 = vsel %vm976, %v975, %v723
      %vm993 = vcmask 195584
      %v995 = vsel %vm993, %v978, %v749
      %v997 = vsel %vm993, %v980, %v751
      %v999 = vsel %vm993, %v982, %v753
      %v1001 = vsel %vm993, %v984, %v755
      %v1003 = vsel %vm993, %v986, %v757
      %v1005 = vsel %vm993, %v988, %v759
      %v1007 = vsel %vm993, %v990, %v761
      %v1009 = vsel %vm993, %v992, %v763
      %vm1010 = vcmask 228352
      %v1012 = vsel %vm1010, %v995, %v789
      %v1014 = vsel %vm1010, %v997, %v791
      %v1016 = vsel %vm1010, %v999, %v793
      %v1018 = vsel %vm1010, %v1001, %v795
      %v1020 = vsel %vm1010, %v1003, %v797
      %v1022 = vsel %vm1010, %v1005, %v799
      %v1024 = vsel %vm1010, %v1007, %v801
      %v1026 = vsel %vm1010, %v1009, %v803
      %vm1027 = vcmask 261120
      %v1029 = vsel %vm1027, %v1012, %v885
      %v1031 = vsel %vm1027, %v1014, %v887
      %v1033 = vsel %vm1027, %v1016, %v889
      %v1035 = vsel %vm1027, %v1018, %v891
      %v1037 = vsel %vm1027, %v1020, %v893
      %v1039 = vsel %vm1027, %v1022, %v895
      %v1041 = vsel %vm1027, %v1024, %v897
      %v1043 = vsel %vm1027, %v1026, %v899
      %v1044 = vld [vmem:[%s290] sm:$0xf]
      %v1045 = vld [vmem:[%s290 + $0x4] sm:$0xf]
      %v1046 = vld [vmem:[%s290 + $0x8] sm:$0xf]
      %v1047 = vld [vmem:[%s290 + $0xc] sm:$0xf]
      %v1048 = vld [vmem:[%s290 + $0x10] sm:$0x3]
      %v1057 = vunpack.c.l.b16 %v1029
      %v1058 = vunpack.c.l.b16 %v1031
      %v1059 = vunpack.c.l.b16 %v1033
      %v1060 = vunpack.c.l.b16 %v1035
      %v1061 = vunpack.c.l.b16 %v1037
      %v1062 = vunpack.c.l.b16 %v1039
      %v1063 = vunpack.c.l.b16 %v1041
      %v1064 = vunpack.c.l.b16 %v1043
      %v1065 = vpack.c.b16 %v1058, %v1057
      %v1066 = vpack.c.b16 %v1060, %v1059
      %v1067 = vpack.c.b16 %v1062, %v1061
      %v1068 = vpack.c.b16 %v1064, %v1063
      %v1074 = vunpack.c.l.b16 %v1044
      %v1075 = vunpack.c.l.b16 %v1045
      %v1076 = vunpack.c.l.b16 %v1046
      %v1077 = vunpack.c.l.b16 %v1047
      %v1078 = vunpack.c.l.b16 %v1048
      %v1079 = vpack.c.b16 %v1075, %v1074
      %v1080 = vpack.c.b16 %v1077, %v1076
      %v1081 = vpack.c.b16 %v1078, %v1078
      %vm1084 = vcmask 293888
      %v1086 = vsel %vm1084, %v1065, 0
      %v1089 = vsel %vm1084, %v1066, 0
      %v1092 = vsel %vm1084, %v1067, 0
      %v1095 = vsel %vm1084, %v1068, 0
      %vm1097 = vcmask 1041408
      %v1099 = vsel %vm1097, %v1081, 0
      %1101 = vmatpush.bf16.msra.mxu0 0
      %1102 = vmatpush.bf16.msra.mxu0 0
      %1103 = vmatpush.bf16.msra.mxu0 0
      %1104 = vmatpush.bf16.msra.mxu0 0
      %1105 = vmatpush.bf16.msra.mxu0 0
      %1106 = vmatpush.bf16.msra.mxu0 %v1099
      %1107 = vmatpush.bf16.msra.mxu0 %v1080
      %1108 = vmatpush.bf16.msra.mxu0 %v1079
      %1109 = vmatmul.bf16.gmra.mxu0 %v1086
      %v1110 = vpop.f32.mrf.mxu0
      %v1111 = vadd.f32 0.0, %v1110
      %v1112 = vpop.f32.mrf.mxu0
      %v1113 = vadd.f32 0.0, %v1112
      %1114 = vmatmul.bf16.gmra.mxu0 %v1089
      %v1115 = vpop.f32.mrf.mxu0
      %v1116 = vadd.f32 0.0, %v1115
      %v1117 = vpop.f32.mrf.mxu0
      %v1118 = vadd.f32 0.0, %v1117
      %1119 = vmatmul.bf16.gmra.mxu0 %v1092
      %v1120 = vpop.f32.mrf.mxu0
      %v1121 = vadd.f32 0.0, %v1120
      %v1122 = vpop.f32.mrf.mxu0
      %v1123 = vadd.f32 0.0, %v1122
      %1124 = vmatmul.bf16.gmra.mxu0 %v1095
      %v1125 = vpop.f32.mrf.mxu0
      %v1126 = vadd.f32 0.0, %v1125
      %v1127 = vpop.f32.mrf.mxu0
      %v1128 = vadd.f32 0.0, %v1127
      %1129 = vdwg.mxu0
      %v1130 = vld [vmem:[%s294] sm:$0x3]
      %v1131 = vpack.c.b16 %v597, %v596
      %v1132 = vpack.c.b16 %v599, %v598
      %v1133 = vpack.c.b16 %v601, %v600
      %v1134 = vpack.c.b16 %v603, %v602
      %v1136 = vsel %vm900, %v1131, 0
      %v1139 = vsel %vm900, %v1132, 0
      %v1142 = vsel %vm900, %v1133, 0
      %v1145 = vsel %vm900, %v1134, 0
      %v1148 = vsel %vm1097, %v1130, 0
      %1150 = vmatpush.bf16.msra.mxu0 0
      %1151 = vmatpush.bf16.msra.mxu0 0
      %1152 = vmatpush.bf16.msra.mxu0 0
      %1153 = vmatpush.bf16.msra.mxu0 0
      %1154 = vmatpush.bf16.msra.mxu0 0
      %1155 = vmatpush.bf16.msra.mxu0 0
      %1156 = vmatpush.bf16.msra.mxu0 0
      %1157 = vmatpush.bf16.msra.mxu0 %v1148
      %1158 = vmatmul.bf16.gmra.mxu0 %v1136
      %v1159 = vpop.f32.mrf.mxu0
      %v1160 = vadd.f32 0.0, %v1159
      %v1161 = vpop.f32.mrf.mxu0
      %v1162 = vadd.f32 0.0, %v1161
      %1163 = vmatmul.bf16.gmra.mxu0 %v1139
      %v1164 = vpop.f32.mrf.mxu0
      %v1165 = vadd.f32 0.0, %v1164
      %v1166 = vpop.f32.mrf.mxu0
      %v1167 = vadd.f32 0.0, %v1166
      %1168 = vmatmul.bf16.gmra.mxu0 %v1142
      %v1169 = vpop.f32.mrf.mxu0
      %v1170 = vadd.f32 0.0, %v1169
      %v1171 = vpop.f32.mrf.mxu0
      %v1172 = vadd.f32 0.0, %v1171
      %1173 = vmatmul.bf16.gmra.mxu0 %v1145
      %v1174 = vpop.f32.mrf.mxu0
      %v1175 = vadd.f32 0.0, %v1174
      %v1176 = vpop.f32.mrf.mxu0
      %v1177 = vadd.f32 0.0, %v1176
      %1178 = vdwg.mxu0
      %v1179 = vpack.c.bf16 %v1111, %v1111
      %v1180 = vpack.c.bf16 %v1113, %v1113
      %v1181 = vpack.c.bf16 %v1116, %v1116
      %v1182 = vpack.c.bf16 %v1118, %v1118
      %v1183 = vpack.c.bf16 %v1121, %v1121
      %v1184 = vpack.c.bf16 %v1123, %v1123
      %v1185 = vpack.c.bf16 %v1126, %v1126
      %v1186 = vpack.c.bf16 %v1128, %v1128
      %vm1187 = vcmask 60416
      %1188 = vst.msk [vmem:[%s302] sm:$0xf] %vm1187, %v1179
      %1189 = vst.msk [vmem:[%s302 + $0x4] sm:$0xf] %vm1187, %v1180
      %1190 = vst.msk [vmem:[%s302 + $0x8] sm:$0xf] %vm1187, %v1181
      %1191 = vst.msk [vmem:[%s302 + $0xc] sm:$0xf] %vm1187, %v1182
      %1192 = vst.msk [vmem:[%s302 + $0x10] sm:$0xf] %vm1187, %v1183
      %1193 = vst.msk [vmem:[%s302 + $0x14] sm:$0xf] %vm1187, %v1184
      %1194 = vst.msk [vmem:[%s302 + $0x18] sm:$0xf] %vm1187, %v1185
      %1195 = vst.msk [vmem:[%s302 + $0x1c] sm:$0xf] %vm1187, %v1186
      %v1196 = vpack.c.bf16 %v1160, %v1160
      %v1197 = vpack.c.bf16 %v1162, %v1162
      %v1198 = vpack.c.bf16 %v1165, %v1165
      %v1199 = vpack.c.bf16 %v1167, %v1167
      %v1200 = vpack.c.bf16 %v1170, %v1170
      %v1201 = vpack.c.bf16 %v1172, %v1172
      %v1202 = vpack.c.bf16 %v1175, %v1175
      %v1203 = vpack.c.bf16 %v1177, %v1177
      %1204 = vst.msk [vmem:[%s310] sm:$0xf] %vm1187, %v1196
      %1205 = vst.msk [vmem:[%s310 + $0x4] sm:$0xf] %vm1187, %v1197
      %1206 = vst.msk [vmem:[%s310 + $0x8] sm:$0xf] %vm1187, %v1198
      %1207 = vst.msk [vmem:[%s310 + $0xc] sm:$0xf] %vm1187, %v1199
      %1208 = vst.msk [vmem:[%s310 + $0x10] sm:$0xf] %vm1187, %v1200
      %1209 = vst.msk [vmem:[%s310 + $0x14] sm:$0xf] %vm1187, %v1201
      %1210 = vst.msk [vmem:[%s310 + $0x18] sm:$0xf] %vm1187, %v1202
      %1211 = vst.msk [vmem:[%s310 + $0x1c] sm:$0xf] %vm1187, %v1203
      %v1212 = vsel %vm925, %v1111, 0.0
      %v1213 = vsel %vm925, %v1113, 0.0
      %v1214 = vadd.f32 %v1212, %v1213
      %v1215 = vsel %vm925, %v1116, 0.0
      %v1216 = vadd.f32 %v1214, %v1215
      %v1217 = vsel %vm925, %v1118, 0.0
      %v1218 = vadd.f32 %v1216, %v1217
      %v1219 = vsel %vm925, %v1121, 0.0
      %v1220 = vadd.f32 %v1218, %v1219
      %v1221 = vsel %vm925, %v1123, 0.0
      %v1222 = vadd.f32 %v1220, %v1221
      %v1223 = vsel %vm925, %v1126, 0.0
      %v1224 = vadd.f32 %v1222, %v1223
      %v1225 = vsel %vm925, %v1128, 0.0
      %v1226 = vadd.f32 %v1224, %v1225
      %v1227 = vrot.slane %v1226, 4
      %v1228 = vadd.f32 %v1226, %v1227
      %v1229 = vrot.slane %v1228, 2
      %v1230 = vadd.f32 %v1228, %v1229
      %v1231 = vrot.slane %v1230, 1
      %v1232 = vadd.f32 %v1230, %v1231
      %v1233 = vmul.f32 %v1111, %v1111
      %v1234 = vmul.f32 %v1113, %v1113
      %v1235 = vmul.f32 %v1116, %v1116
      %v1236 = vmul.f32 %v1118, %v1118
      %v1237 = vmul.f32 %v1121, %v1121
      %v1238 = vmul.f32 %v1123, %v1123
      %v1239 = vmul.f32 %v1126, %v1126
      %v1240 = vmul.f32 %v1128, %v1128
      %v1241 = vsel %vm925, %v1233, 0.0
      %v1242 = vsel %vm925, %v1234, 0.0
      %v1243 = vadd.f32 %v1241, %v1242
      %v1244 = vsel %vm925, %v1235, 0.0
      %v1245 = vadd.f32 %v1243, %v1244
      %v1246 = vsel %vm925, %v1236, 0.0
      %v1247 = vadd.f32 %v1245, %v1246
      %v1248 = vsel %vm925, %v1237, 0.0
      %v1249 = vadd.f32 %v1247, %v1248
      %v1250 = vsel %vm925, %v1238, 0.0
      %v1251 = vadd.f32 %v1249, %v1250
      %v1252 = vsel %vm925, %v1239, 0.0
      %v1253 = vadd.f32 %v1251, %v1252
      %v1254 = vsel %vm925, %v1240, 0.0
      %v1255 = vadd.f32 %v1253, %v1254
      %v1256 = vrot.slane %v1255, 4
      %v1257 = vadd.f32 %v1255, %v1256
      %v1258 = vrot.slane %v1257, 2
      %v1259 = vadd.f32 %v1257, %v1258
      %v1260 = vrot.slane %v1259, 1
      %v1261 = vadd.f32 %v1259, %v1260
      %v1262 = vsel %vm925, %v1160, 0.0
      %v1263 = vsel %vm925, %v1162, 0.0
      %v1264 = vadd.f32 %v1262, %v1263
      %v1265 = vsel %vm925, %v1165, 0.0
      %v1266 = vadd.f32 %v1264, %v1265
      %v1267 = vsel %vm925, %v1167, 0.0
      %v1268 = vadd.f32 %v1266, %v1267
      %v1269 = vsel %vm925, %v1170, 0.0
      %v1270 = vadd.f32 %v1268, %v1269
      %v1271 = vsel %vm925, %v1172, 0.0
      %v1272 = vadd.f32 %v1270, %v1271
      %v1273 = vsel %vm925, %v1175, 0.0
      %v1274 = vadd.f32 %v1272, %v1273
      %v1275 = vsel %vm925, %v1177, 0.0
      %v1276 = vadd.f32 %v1274, %v1275
      %v1277 = vrot.slane %v1276, 4
      %v1278 = vadd.f32 %v1276, %v1277
      %v1279 = vrot.slane %v1278, 2
      %v1280 = vadd.f32 %v1278, %v1279
      %v1281 = vrot.slane %v1280, 1
      %v1282 = vadd.f32 %v1280, %v1281
      %v1283 = vmul.f32 %v1160, %v1160
      %v1284 = vmul.f32 %v1162, %v1162
      %v1285 = vmul.f32 %v1165, %v1165
      %v1286 = vmul.f32 %v1167, %v1167
      %v1287 = vmul.f32 %v1170, %v1170
      %v1288 = vmul.f32 %v1172, %v1172
      %v1289 = vmul.f32 %v1175, %v1175
      %v1290 = vmul.f32 %v1177, %v1177
      %v1291 = vsel %vm925, %v1283, 0.0
      %v1292 = vsel %vm925, %v1284, 0.0
      %v1293 = vadd.f32 %v1291, %v1292
      %v1294 = vsel %vm925, %v1285, 0.0
      %v1295 = vadd.f32 %v1293, %v1294
      %v1296 = vsel %vm925, %v1286, 0.0
      %v1297 = vadd.f32 %v1295, %v1296
      %v1298 = vsel %vm925, %v1287, 0.0
      %v1299 = vadd.f32 %v1297, %v1298
      %v1300 = vsel %vm925, %v1288, 0.0
      %v1301 = vadd.f32 %v1299, %v1300
      %v1302 = vsel %vm925, %v1289, 0.0
      %v1303 = vadd.f32 %v1301, %v1302
      %v1304 = vsel %vm925, %v1290, 0.0
      %v1305 = vadd.f32 %v1303, %v1304
      %v1306 = vrot.slane %v1305, 4
      %v1307 = vadd.f32 %v1305, %v1306
      %v1308 = vrot.slane %v1307, 2
      %v1309 = vadd.f32 %v1307, %v1308
      %v1310 = vrot.slane %v1309, 1
      %v1311 = vadd.f32 %v1309, %v1310
      %vm1312 = vcmask 1040384
      %v1313 = vsel %vm1312, %v1232, %v1261
      %v1314 = vsel %vm1097, %v1313, %v1282
      %vm1315 = vcmask 1042432
      %v1316 = vsel %vm1315, %v1314, %v1311
      %1317 = vst.msk [vmem:[%s317] sm:$0xf] %vm1187, %v1316
      %p1318 = scmp.lt.s32.totalorder %s21, 1
      %s1319 = scalar_select %p1318, %s21, 1
      %p1320 = scmp.lt.s32.totalorder %s22, 0
      %s1321 = scalar_select %p1320, %s22, 0
      %s1322 = smul.addr %s1319, 8
      %s1323 = sadd.s32 %s1321, %s1322
      %s1324 = smul.addr %s1323, 4
      %s1325 = scalar_lea.vmem %s3, %s1324
      %p1326 = scmp.lt.s32.totalorder %s21, 1
      %s1327 = scalar_select %p1326, %s21, 1
      %p1328 = scmp.lt.s32.totalorder %s22, 0
      %s1329 = scalar_select %p1328, %s22, 0
      %s1330 = smul.addr %s1327, 8
      %s1331 = sadd.s32 %s1329, %s1330
      %s1332 = smul.addr %s1331, 4
      %s1333 = scalar_lea.vmem %s4, %s1332
      %p1334 = scmp.lt.s32.totalorder %s21, 1
      %s1335 = scalar_select %p1334, %s21, 1
      %p1336 = scmp.lt.s32.totalorder %s22, 0
      %s1337 = scalar_select %p1336, %s22, 0
      %s1338 = sadd.s32 %s1337, %s1335
      %s1339 = smul.addr %s1338, 4
      %s1340 = scalar_lea.vmem %s5, %s1339
      // Predicated region
      $region33: #{_lambda_.3} parent=31 // pred_check
        %p1341 = pneg %p127
      $region34: #{_lambda_.3} parent=31 // pred_check_branch
        %1343 = sbr.rel (%p1341) target = $region36
      $region35: #{_lambda_.3} parent=31 // pred_region
        _
      $region36: #{_lambda_.3} parent=31 // pred_fallthru
        _
      // Predicated region
      $region37: #{_lambda_.3} parent=31 // pred_check
        %p1344 = pneg %p155
      $region38: #{_lambda_.3} parent=31 // pred_check_branch
        %1346 = sbr.rel (%p1344) target = $region40
      $region39: #{_lambda_.3} parent=31 // pred_region
        _
      $region40: #{_lambda_.3} parent=31 // pred_fallthru
        _
      // Predicated region
      $region41: #{_lambda_.3} parent=31 // pred_check
        %p1347 = pneg %p183
      $region42: #{_lambda_.3} parent=31 // pred_check_branch
        %1349 = sbr.rel (%p1347) target = $region44
      $region43: #{_lambda_.3} parent=31 // pred_region
        _
      $region44: #{_lambda_.3} parent=31 // pred_fallthru
        _
    $region32: #{_lambda_.3} parent=5 // pred_fallthru
      _
    %p1350 = scmp.le.s32.totalorder 2, %s12
    // Predicated region
    $region45: #{_lambda_.3} parent=5 // pred_check
      %p1351 = pneg %p1350
    $region46: #{_lambda_.3} parent=5 // pred_check_branch
      %1353 = sbr.rel (%p1351) target = $region48
    $region47: #{_lambda_.3} parent=5 // pred_region
      %s1354 = ssub.s32 %s12, 2
      // Predicated region
      $region49: #{_lambda_.3} parent=47 // pred_check
        %p1355 = pneg %p133
      $region50: #{_lambda_.3} parent=47 // pred_check_branch
        %1357 = sbr.rel (%p1355) target = $region52
      $region51: #{_lambda_.3} parent=47 // pred_region
        %p1358 = scmp.lt.s32.totalorder %s23, 1
        %s1359 = scalar_select %p1358, %s23, 1
        %p1360 = scmp.lt.s32.totalorder %s24, 0
        %s1361 = scalar_select %p1360, %s24, 0
        %s1362 = smul.addr %s1359, 8
        %s1363 = sadd.s32 %s1361, %s1362
        %s1364 = smul.addr %s1363, 4
        %s1365 = scalar_lea.vmem %s3, %s1364
      $region52: #{_lambda_.3} parent=47 // pred_fallthru
        _
      // Predicated region
      $region53: #{_lambda_.3} parent=47 // pred_check
        %p1366 = pneg %p161
      $region54: #{_lambda_.3} parent=47 // pred_check_branch
        %1368 = sbr.rel (%p1366) target = $region56
      $region55: #{_lambda_.3} parent=47 // pred_region
        %p1369 = scmp.lt.s32.totalorder %s23, 1
        %s1370 = scalar_select %p1369, %s23, 1
        %p1371 = scmp.lt.s32.totalorder %s24, 0
        %s1372 = scalar_select %p1371, %s24, 0
        %s1373 = smul.addr %s1370, 8
        %s1374 = sadd.s32 %s1372, %s1373
        %s1375 = smul.addr %s1374, 4
        %s1376 = scalar_lea.vmem %s4, %s1375
      $region56: #{_lambda_.3} parent=47 // pred_fallthru
        _
      // Predicated region
      $region57: #{_lambda_.3} parent=47 // pred_check
        %p1377 = pneg %p189
      $region58: #{_lambda_.3} parent=47 // pred_check_branch
        %1379 = sbr.rel (%p1377) target = $region60
      $region59: #{_lambda_.3} parent=47 // pred_region
        %p1380 = scmp.lt.s32.totalorder %s23, 1
        %s1381 = scalar_select %p1380, %s23, 1
        %p1382 = scmp.lt.s32.totalorder %s24, 0
        %s1383 = scalar_select %p1382, %s24, 0
        %s1384 = sadd.s32 %s1383, %s1381
        %s1385 = smul.addr %s1384, 4
        %s1386 = scalar_lea.vmem %s5, %s1385
      $region60: #{_lambda_.3} parent=47 // pred_fallthru
        _
    $region48: #{_lambda_.3} parent=5 // pred_fallthru
      _
  $region6: #{_lambda_.3} parent=0 // loop_footer
    %s16 = sadd.s32 1, %s12
  $region7: #{_lambda_.3} parent=0 // loop_footer_branch
    %11 = sbr.rel target = $region3
  $region8: #{_lambda_.3} parent=0 // loop_exit
    _

</llo_original>
